<compile_context>
chip_gen: v5e
topology: v5e:2x2
jax: 0.10.0
libtpu: 0.0.40
codegen_flags: <defaults>
</compile_context>

<pallas_src>
import functools
import math

import jax
import jax.numpy as jnp
from jax.experimental import pallas as pl
from jax.experimental.pallas import tpu as pltpu

LN_EPS = 1e-12                       # DistilBERT LayerNorm eps
VMEM_LIMIT_BYTES = 48 * 1024 * 1024  # scoped-VMEM limit (headroom on v7x)


# ----------------------------- in-kernel helpers -----------------------------

def _layer_norm_f32(x, g, b):
    mu = jnp.mean(x, axis=-1, keepdims=True)
    var = jnp.mean(jnp.square(x - mu), axis=-1, keepdims=True)
    return (x - mu) * jax.lax.rsqrt(var + LN_EPS) * g + b


def _gelu_f32(x):
    # tanh-approx GELU (HF DistilBERT uses exact erf GELU; tanh approx is
    # numerically very close and lowers cleanly to the EUP).
    c = jnp.sqrt(2.0 / jnp.pi).astype(x.dtype)
    return 0.5 * x * (1.0 + jnp.tanh(c * (x + 0.044715 * x * x * x)))


# --------------------------------- kernels -----------------------------------

def qkv_proj_kernel(x_ref, w_ref, b_ref, o_ref):
    # x: (TM, H) bf16, w: (H, 3H) bf16, b: (1, 3H) f32 -> o: (TM, 3H) bf16
    acc = jnp.dot(x_ref[...], w_ref[...], preferred_element_type=jnp.float32)
    o_ref[...] = (acc + b_ref[...]).astype(o_ref.dtype)


def flash_attn_kernel(q_ref, k_ref, v_ref, o_ref, m_sc, l_sc, acc_sc, *, scale):
    # grid = (B*nH, S//TQ, S//TKV); kv axis innermost ("arbitrary").
    # q: (TQ, hd), k/v: (TKV, hd) bf16 (leading batch-head dim squeezed out).
    kv = pl.program_id(2)

    @pl.when(kv == 0)
    def _():
        m_sc[...] = jnp.full(m_sc.shape, -jnp.inf, m_sc.dtype)
        l_sc[...] = jnp.zeros(l_sc.shape, l_sc.dtype)
        acc_sc[...] = jnp.zeros(acc_sc.shape, acc_sc.dtype)

    # fold the softmax scale into q (smaller tensor than the score tile).
    q = q_ref[...] * scale
    k = k_ref[...]
    v = v_ref[...]

    # contraction over the head dim (lane axis); fp32 accumulation on the MXU.
    s = jax.lax.dot_general(
        q, k, (((1,), (1,)), ((), ())),
        preferred_element_type=jnp.float32)                  # (TQ, TKV) f32

    m_prev = m_sc[...]
    m_new = jnp.maximum(m_prev, jnp.max(s, axis=-1, keepdims=True))
    alpha = jnp.exp(m_prev - m_new)
    p = jnp.exp(s - m_new)
    l_sc[...] = alpha * l_sc[...] + jnp.sum(p, axis=-1, keepdims=True)
    acc_sc[...] = alpha * acc_sc[...] + jnp.dot(
        p.astype(v.dtype), v, preferred_element_type=jnp.float32)
    m_sc[...] = m_new

    @pl.when(kv == pl.num_programs(2) - 1)
    def _():
        inv_l = pl.reciprocal(l_sc[...], approx=True)
        o_ref[...] = (acc_sc[...] * inv_l).astype(o_ref.dtype)


def post_attn_kernel(ctx_ref, x_ref,
                     wo_ref, bo_ref, g1_ref, b1_ref,
                     w1_ref, c1_ref, w2_ref, c2_ref, g2_ref, b2_ref,
                     o_ref):
    # ctx/x: (TM, H) bf16; weights bf16; biases / LN params f32.
    x_f32 = x_ref[...].astype(jnp.float32)

    attn = jnp.dot(ctx_ref[...], wo_ref[...],
                   preferred_element_type=jnp.float32) + bo_ref[...]
    h1 = _layer_norm_f32(attn + x_f32, g1_ref[...], b1_ref[...])   # (TM, H) f32

    f = jnp.dot(h1.astype(w1_ref.dtype), w1_ref[...],
                preferred_element_type=jnp.float32) + c1_ref[...]
    f = _gelu_f32(f)
    f = jnp.dot(f.astype(w2_ref.dtype), w2_ref[...],
                preferred_element_type=jnp.float32) + c2_ref[...]

    h2 = _layer_norm_f32(f + h1, g2_ref[...], b2_ref[...])
    o_ref[...] = h2.astype(o_ref.dtype)


# -------------------------------- wrappers ------------------------------------

def _pick_tile(n, target):
    """Largest divisor of n that is <= target and a multiple of 8, else n."""
    for d in range(min(target, n), 7, -1):
        if n % d == 0 and d % 8 == 0:
            return d
    return n


def run_qkv_proj(x2, wqkv, bqkv, *, tm):
    BS, H = x2.shape
    H3 = wqkv.shape[1]
    assert BS % tm == 0
    return pl.pallas_call(
        qkv_proj_kernel,
        out_shape=jax.ShapeDtypeStruct((BS, H3), x2.dtype),
        grid=(BS // tm,),
        in_specs=[
            pl.BlockSpec((tm, H), lambda i: (i, 0)),
            pl.BlockSpec((H, H3), lambda i: (0, 0)),
            pl.BlockSpec((1, H3), lambda i: (0, 0)),
        ],
        out_specs=pl.BlockSpec((tm, H3), lambda i: (i, 0)),
        compiler_params=pltpu.CompilerParams(
            dimension_semantics=("parallel",),
            vmem_limit_bytes=VMEM_LIMIT_BYTES),
    )(x2, wqkv, bqkv)


def run_flash_attention(q, k, v, *, tq, tkv):
    BH, S, hd = q.shape
    assert S % tq == 0 and S % tkv == 0
    scale = 1.0 / math.sqrt(hd)
    return pl.pallas_call(
        functools.partial(flash_attn_kernel, scale=scale),
        out_shape=jax.ShapeDtypeStruct((BH, S, hd), q.dtype),
        grid_spec=pltpu.PrefetchScalarGridSpec(
            num_scalar_prefetch=0,
            grid=(BH, S // tq, S // tkv),
            in_specs=[
                pl.BlockSpec((None, tq, hd), lambda b, qi, ki: (b, qi, 0)),
                pl.BlockSpec((None, tkv, hd), lambda b, qi, ki: (b, ki, 0)),
                pl.BlockSpec((None, tkv, hd), lambda b, qi, ki: (b, ki, 0)),
            ],
            out_specs=pl.BlockSpec((None, tq, hd), lambda b, qi, ki: (b, qi, 0)),
            scratch_shapes=[
                pltpu.VMEM((tq, 1), jnp.float32),    # m
                pltpu.VMEM((tq, 1), jnp.float32),    # l
                pltpu.VMEM((tq, hd), jnp.float32),   # acc
            ]),
        compiler_params=pltpu.CompilerParams(
            dimension_semantics=("parallel", "parallel", "arbitrary"),
            vmem_limit_bytes=VMEM_LIMIT_BYTES),
    )(q, k, v)


def run_post_attn(ctx, x2, lp, *, tm):
    BS, H = x2.shape
    F = lp['w1'].shape[1]
    assert BS % tm == 0
    full = lambda i: (0, 0)
    return pl.pallas_call(
        post_attn_kernel,
        out_shape=jax.ShapeDtypeStruct((BS, H), x2.dtype),
        grid=(BS // tm,),
        in_specs=[
            pl.BlockSpec((tm, H), lambda i: (i, 0)),   # ctx
            pl.BlockSpec((tm, H), lambda i: (i, 0)),   # residual x
            pl.BlockSpec((H, H), full),                # wo
            pl.BlockSpec((1, H), full),                # bo
            pl.BlockSpec((1, H), full),                # g1
            pl.BlockSpec((1, H), full),                # b1
            pl.BlockSpec((H, F), full),                # w1
            pl.BlockSpec((1, F), full),                # c1
            pl.BlockSpec((F, H), full),                # w2
            pl.BlockSpec((1, H), full),                # c2
            pl.BlockSpec((1, H), full),                # g2
            pl.BlockSpec((1, H), full),                # b2
        ],
        out_specs=pl.BlockSpec((tm, H), lambda i: (i, 0)),
        compiler_params=pltpu.CompilerParams(
            dimension_semantics=("parallel",),
            vmem_limit_bytes=VMEM_LIMIT_BYTES),
    )(ctx, x2, lp['wo'], lp['bo'], lp['g1'], lp['b1'],
      lp['w1'], lp['c1'], lp['w2'], lp['c2'], lp['g2'], lp['b2'])


def encoder_layer(h, lp, *, n_heads, tm, tq, tkv):
    """One DistilBERT TransformerBlock: MHA + post-LN, FFN(GELU) + post-LN."""
    B, S, H = h.shape
    hd = H // n_heads
    x2 = h.reshape(B * S, H)

    qkv = run_qkv_proj(x2, lp['wqkv'], lp['bqkv'], tm=tm)          # (BS, 3H)
    # head-major re-layout is plain JAX/XLA glue between kernels.
    qkv = qkv.reshape(B, S, 3, n_heads, hd).transpose(2, 0, 3, 1, 4)
    q = qkv[0].reshape(B * n_heads, S, hd)
    k = qkv[1].reshape(B * n_heads, S, hd)
    v = qkv[2].reshape(B * n_heads, S, hd)

    ctx = run_flash_attention(q, k, v, tq=tq, tkv=tkv)             # (B*nH, S, hd)
    ctx = ctx.reshape(B, n_heads, S, hd).transpose(0, 2, 1, 3).reshape(B * S, H)

    h2 = run_post_attn(ctx, x2, lp, tm=tm)                         # (BS, H)
    return h2.reshape(B, S, H)


def _embed(input_ids, params):
    B, S = input_ids.shape
    tok = jnp.take(params['word_emb'], input_ids, axis=0)          # (B, S, H) f32
    pos = params['pos_emb'][:S][None, :, :]
    emb = tok + pos
    mu = jnp.mean(emb, axis=-1, keepdims=True)
    var = jnp.mean(jnp.square(emb - mu), axis=-1, keepdims=True)
    h = (emb - mu) * jax.lax.rsqrt(var + LN_EPS) * params['emb_g'] + params['emb_b']
    return h.astype(jnp.bfloat16)                                  # bf16 activations


def bert_classifier_forward(input_ids, params, *, n_heads,
                            row_tile=None, q_tile=None, kv_tile=None):
    """Equivalent of BERTClassifier.forward on pre-tokenized input_ids."""
    B, S = input_ids.shape
    BS = B * S
    tm = row_tile or _pick_tile(BS, 256)
    tq = q_tile or _pick_tile(S, 256)
    tkv = kv_tile or _pick_tile(S, 256)

    h = _embed(input_ids, params)
    for lp in params['layers']:
        h = encoder_layer(h, lp, n_heads=n_heads, tm=tm, tq=tq, tkv=tkv)

    # CLS token + classifier head: (B, H) @ (H, 2) in plain JAX (OUT=2 is
    # lane-starved; a pallas_call would be pure launch/DMA overhead).
    cls = h[:, 0, :].astype(jnp.float32)
    return cls @ params['cls_w'] + params['cls_b']                 # (B, OUT) f32


# ------------------------- pure-JAX reference (same dtypes) -------------------

def reference_forward(input_ids, params, *, n_heads):
    h = _embed(input_ids, params)
    B, S, H = h.shape
    hd = H // n_heads
    for lp in params['layers']:
        x2 = h.reshape(B * S, H)
        qkv = (jnp.dot(x2, lp['wqkv'], preferred_element_type=jnp.float32)
               + lp['bqkv']).astype(jnp.bfloat16)
        qkv = qkv.reshape(B, S, 3, n_heads, hd).transpose(2, 0, 3, 1, 4)
        q, k, v = qkv[0], qkv[1], qkv[2]                           # (B, nH, S, hd)
        s = jnp.einsum('bhqd,bhkd->bhqk', q, k,
                       preferred_element_type=jnp.float32) / math.sqrt(hd)
        p = jax.nn.softmax(s, axis=-1)
        ctx = jnp.einsum('bhqk,bhkd->bhqd', p.astype(jnp.bfloat16), v,
                         preferred_element_type=jnp.float32).astype(jnp.bfloat16)
        ctx = ctx.transpose(0, 2, 1, 3).reshape(B * S, H)
        attn = jnp.dot(ctx, lp['wo'],
                       preferred_element_type=jnp.float32) + lp['bo']
        h1 = _layer_norm_f32(attn + x2.astype(jnp.float32), lp['g1'], lp['b1'])
        f = jnp.dot(h1.astype(jnp.bfloat16), lp['w1'],
                    preferred_element_type=jnp.float32) + lp['c1']
        f = _gelu_f32(f)
        f = jnp.dot(f.astype(jnp.bfloat16), lp['w2'],
                    preferred_element_type=jnp.float32) + lp['c2']
        h2 = _layer_norm_f32(f + h1, lp['g2'], lp['b2'])
        h = h2.astype(jnp.bfloat16).reshape(B, S, H)
    cls = h[:, 0, :].astype(jnp.float32)
    return cls @ params['cls_w'] + params['cls_b']


# ----------------------------- parameter init ----------------------------------

def _dense(key, fan_in, fan_out):
    return 0.02 * jax.random.normal(key, (fan_in, fan_out), jnp.float32)


def init_params(key, vocab, max_pos, H, n_layers, F, out_dim):
    ks = jax.random.split(key, 3 + n_layers)
    params = {
        'word_emb': 0.02 * jax.random.normal(ks[0], (vocab, H), jnp.float32),
        'pos_emb': 0.02 * jax.random.normal(ks[1], (max_pos, H), jnp.float32),
        'emb_g': jnp.ones((1, H), jnp.float32),
        'emb_b': jnp.zeros((1, H), jnp.float32),
        'layers': [],
    }
    for i in range(n_layers):
        lk = jax.random.split(ks[2 + i], 6)
        wq, wk, wv = _dense(lk[0], H, H), _dense(lk[1], H, H), _dense(lk[2], H, H)
        params['layers'].append({
            'wqkv': jnp.concatenate([wq, wk, wv], axis=1).astype(jnp.bfloat16),
            'bqkv': jnp.zeros((1, 3 * H), jnp.float32),
            'wo': _dense(lk[3], H, H).astype(jnp.bfloat16),
            'bo': jnp.zeros((1, H), jnp.float32),
            'g1': jnp.ones((1, H), jnp.float32), 'b1': jnp.zeros((1, H), jnp.float32),
            'w1': _dense(lk[4], H, F).astype(jnp.bfloat16),
            'c1': jnp.zeros((1, F), jnp.float32),
            'w2': _dense(lk[5], F, H).astype(jnp.bfloat16),
            'c2': jnp.zeros((1, H), jnp.float32),
            'g2': jnp.ones((1, H), jnp.float32), 'b2': jnp.zeros((1, H), jnp.float32),
        })
    params['cls_w'] = _dense(ks[-1], H, out_dim)       # nn.Linear(H, output_dim)
    params['cls_b'] = jnp.zeros((1, out_dim), jnp.float32)
    return params


# ----------------------------------- main --------------------------------------

if __name__ == "__main__":
    B, S = 2, 16
    VOCAB, MAXPOS = 100, 32
    H, NH, F = 32, 4, 64
    NLAYERS, OUT = 2, 2

    key = jax.random.PRNGKey(0)
    kp, kids = jax.random.split(key)
    params = init_params(kp, VOCAB, MAXPOS, H, NLAYERS, F, OUT)
    input_ids = jax.random.randint(kids, (B, S), 0, VOCAB, dtype=jnp.int32)

    # small tiles so the toy run actually exercises multi-step grids
    # (row grid = 4 steps, flash grid = (8, 2, 2)); real shapes use the
    # auto-derived 128/256-sized tiles.
    fwd = jax.jit(functools.partial(bert_classifier_forward,
                                    n_heads=NH, row_tile=8, q_tile=8, kv_tile=8))
    logits = fwd(input_ids, params)
    jax.block_until_ready(logits)

    assert logits.shape == (B, OUT) and logits.dtype == jnp.float32
    assert bool(jnp.all(jnp.isfinite(logits)))

    # cross-check against a same-dtype pure-JAX reference (full softmax).
    ref = jax.jit(functools.partial(reference_forward, n_heads=NH))(input_ids, params)
    jax.block_until_ready(ref)
    max_err = float(jnp.max(jnp.abs(logits - ref)))
    assert max_err < 5e-2, f"Pallas vs reference mismatch: {max_err}"

    print("KERNEL_OK")
</pallas_src>

<mosaic_0001>
module attributes {stable_mosaic.version = 11 : i64} {
  func.func @qkv_proj_kernel(%arg0: i32, %arg1: memref<8x32xbf16, #tpu.memory_space<vmem>>, %arg2: memref<32x96xbf16, #tpu.memory_space<vmem>>, %arg3: memref<1x96xf32, #tpu.memory_space<vmem>>, %arg4: memref<8x96xbf16, #tpu.memory_space<vmem>>) attributes {dimension_semantics = [#tpu.dimension_semantics<parallel>], iteration_bounds = array<i64: 4>, scalar_prefetch = 0 : i64, scratch_operands = 0 : i64, tpu.core_type = #tpu.core_type<tc>, window_params = [{transform_indices = @transform_0, window_bounds = array<i64: 8, 32>}, {pipeline_mode = #tpu.pipeline_mode<synchronous>, transform_indices = @transform_1, window_bounds = array<i64: 32, 96>}, {pipeline_mode = #tpu.pipeline_mode<synchronous>, transform_indices = @transform_2, window_bounds = array<i64: 1, 96>}, {transform_indices = @transform_3, window_bounds = array<i64: 8, 96>}]} {
    %c0 = arith.constant 0 : index
    %c0_0 = arith.constant 0 : index
    %0 = vector.load %arg1[%c0, %c0_0] : memref<8x32xbf16, #tpu.memory_space<vmem>>, vector<8x32xbf16>
    %c0_1 = arith.constant 0 : index
    %c0_2 = arith.constant 0 : index
    %1 = vector.load %arg2[%c0_1, %c0_2] : memref<32x96xbf16, #tpu.memory_space<vmem>>, vector<32x96xbf16>
    %cst = arith.constant dense<0.000000e+00> : vector<8x96xf32>
    %2 = tpu.matmul %0, %1, %cst {dimension_numbers = #tpu.dot_dimension_numbers<[1], [0], [0], [1], [0, 0, 1, 1], [], []>} : vector<8x32xbf16>, vector<32x96xbf16>, vector<8x96xf32> -> vector<8x96xf32>
    %c0_3 = arith.constant 0 : index
    %c0_4 = arith.constant 0 : index
    %3 = vector.load %arg3[%c0_3, %c0_4] : memref<1x96xf32, #tpu.memory_space<vmem>>, vector<1x96xf32>
    %4 = vector.broadcast %3 : vector<1x96xf32> to vector<8x96xf32>
    %5 = arith.addf %2, %4 : vector<8x96xf32>
    %6 = arith.truncf %5 : vector<8x96xf32> to vector<8x96xbf16>
    %c0_5 = arith.constant 0 : index
    %c0_6 = arith.constant 0 : index
    %7 = vector.load %arg4[%c0_5, %c0_6] : memref<8x96xbf16, #tpu.memory_space<vmem>>, vector<8x96xbf16>
    tpu.vector_store %arg4[%c0_5, %c0_6], %6 {strides = array<i32>} : memref<8x96xbf16, #tpu.memory_space<vmem>>, vector<8x96xbf16>,
    return
  }
  func.func @transform_0(%arg0: i32) -> (i32, i32) {
    %c0_i32 = arith.constant 0 : i32
    %c0_i32_0 = arith.constant 0 : i32
    return %arg0, %c0_i32 : i32, i32
  }
  func.func @transform_1(%arg0: i32) -> (i32, i32) {
    %c0_i32 = arith.constant 0 : i32
    %c0_i32_0 = arith.constant 0 : i32
    %c0_i32_1 = arith.constant 0 : i32
    return %c0_i32, %c0_i32_0 : i32, i32
  }
  func.func @transform_2(%arg0: i32) -> (i32, i32) {
    %c0_i32 = arith.constant 0 : i32
    %c0_i32_0 = arith.constant 0 : i32
    %c0_i32_1 = arith.constant 0 : i32
    return %c0_i32, %c0_i32_0 : i32, i32
  }
  func.func @transform_3(%arg0: i32) -> (i32, i32) {
    %c0_i32 = arith.constant 0 : i32
    %c0_i32_0 = arith.constant 0 : i32
    return %arg0, %c0_i32 : i32, i32
  }
}

module attributes {stable_mosaic.version = 11 : i64} {
  func.func @flash_attn_kernel(%arg0: i32, %arg1: i32, %arg2: i32, %arg3: memref<1x8x8xbf16, #tpu.memory_space<vmem>>, %arg4: memref<1x8x8xbf16, #tpu.memory_space<vmem>>, %arg5: memref<1x8x8xbf16, #tpu.memory_space<vmem>>, %arg6: memref<1x8x8xbf16, #tpu.memory_space<vmem>>, %arg7: memref<8x1xf32, #tpu.memory_space<vmem>>, %arg8: memref<8x1xf32, #tpu.memory_space<vmem>>, %arg9: memref<8x8xf32, #tpu.memory_space<vmem>>) attributes {dimension_semantics = [#tpu.dimension_semantics<parallel>, #tpu.dimension_semantics<parallel>, #tpu.dimension_semantics<arbitrary>], iteration_bounds = array<i64: 8, 2, 2>, scalar_prefetch = 0 : i64, scratch_operands = 3 : i64, tpu.core_type = #tpu.core_type<tc>, window_params = [{transform_indices = @transform_0, window_bounds = array<i64: 1, 8, 8>}, {transform_indices = @transform_1, window_bounds = array<i64: 1, 8, 8>}, {transform_indices = @transform_2, window_bounds = array<i64: 1, 8, 8>}, {transform_indices = @transform_3, window_bounds = array<i64: 1, 8, 8>}]} {
    %c0_i32 = arith.constant 0 : i32
    %0 = arith.cmpi eq, %arg2, %c0_i32 : i32
    %1 = arith.extui %0 : i1 to i32
    %c0_i32_0 = arith.constant 0 : i32
    %2 = arith.cmpi ne, %1, %c0_i32_0 : i32
    scf.if %2 {
      %cst_26 = arith.constant 0xFF800000 : f32
      %38 = vector.broadcast %cst_26 : f32 to vector<8x1xf32>
      %c0_27 = arith.constant 0 : index
      %c0_28 = arith.constant 0 : index
      %39 = vector.load %arg7[%c0_27, %c0_28] : memref<8x1xf32, #tpu.memory_space<vmem>>, vector<8x1xf32>
      tpu.vector_store %arg7[%c0_27, %c0_28], %38 {strides = array<i32>} : memref<8x1xf32, #tpu.memory_space<vmem>>, vector<8x1xf32>,
      %cst_29 = arith.constant 0.000000e+00 : f32
      %40 = vector.broadcast %cst_29 : f32 to vector<8x1xf32>
      %c0_30 = arith.constant 0 : index
      %c0_31 = arith.constant 0 : index
      %41 = vector.load %arg8[%c0_30, %c0_31] : memref<8x1xf32, #tpu.memory_space<vmem>>, vector<8x1xf32>
      tpu.vector_store %arg8[%c0_30, %c0_31], %40 {strides = array<i32>} : memref<8x1xf32, #tpu.memory_space<vmem>>, vector<8x1xf32>,
      %cst_32 = arith.constant 0.000000e+00 : f32
      %42 = vector.broadcast %cst_32 : f32 to vector<8x8xf32>
      %c0_33 = arith.constant 0 : index
      %c0_34 = arith.constant 0 : index
      %43 = vector.load %arg9[%c0_33, %c0_34] : memref<8x8xf32, #tpu.memory_space<vmem>>, vector<8x8xf32>
      tpu.vector_store %arg9[%c0_33, %c0_34], %42 {strides = array<i32>} : memref<8x8xf32, #tpu.memory_space<vmem>>, vector<8x8xf32>,
    } else {
    }
    %c0 = arith.constant 0 : index
    %c0_1 = arith.constant 0 : index
    %c0_2 = arith.constant 0 : index
    %3 = vector.load %arg3[%c0, %c0_1, %c0_2] : memref<1x8x8xbf16, #tpu.memory_space<vmem>>, vector<1x8x8xbf16>
    %4 = vector.shape_cast %3 : vector<1x8x8xbf16> to vector<8x8xbf16>
    %cst = arith.constant 3.535160e-01 : bf16
    %5 = vector.broadcast %cst : bf16 to vector<8x8xbf16>
    %6 = arith.mulf %4, %5 : vector<8x8xbf16>
    %c0_3 = arith.constant 0 : index
    %c0_4 = arith.constant 0 : index
    %c0_5 = arith.constant 0 : index
    %7 = vector.load %arg4[%c0_3, %c0_4, %c0_5] : memref<1x8x8xbf16, #tpu.memory_space<vmem>>, vector<1x8x8xbf16>
    %8 = vector.shape_cast %7 : vector<1x8x8xbf16> to vector<8x8xbf16>
    %c0_6 = arith.constant 0 : index
    %c0_7 = arith.constant 0 : index
    %c0_8 = arith.constant 0 : index
    %9 = vector.load %arg5[%c0_6, %c0_7, %c0_8] : memref<1x8x8xbf16, #tpu.memory_space<vmem>>, vector<1x8x8xbf16>
    %10 = vector.shape_cast %9 : vector<1x8x8xbf16> to vector<8x8xbf16>
    %cst_9 = arith.constant dense<0.000000e+00> : vector<8x8xf32>
    %11 = tpu.matmul %6, %8, %cst_9 {dimension_numbers = #tpu.dot_dimension_numbers<[1], [1], [0], [0], [0, 0, 1, 0], [], []>} : vector<8x8xbf16>, vector<8x8xbf16>, vector<8x8xf32> -> vector<8x8xf32>
    %c0_10 = arith.constant 0 : index
    %c0_11 = arith.constant 0 : index
    %12 = vector.load %arg7[%c0_10, %c0_11] : memref<8x1xf32, #tpu.memory_space<vmem>>, vector<8x1xf32>
    %cst_12 = arith.constant dense<0xFF800000> : vector<8xf32>
    %13 = vector.multi_reduction <maximumf>, %11, %cst_12 [1] : vector<8x8xf32> to vector<8xf32>
    %14 = vector.shape_cast %13 : vector<8xf32> to vector<8x1xf32>
    %15 = arith.maximumf %12, %14 : vector<8x1xf32>
    %16 = arith.subf %12, %15 : vector<8x1xf32>
    %17 = math.exp %16 : vector<8x1xf32>
    %18 = vector.broadcast %15 : vector<8x1xf32> to vector<8x8xf32>
    %19 = arith.subf %11, %18 : vector<8x8xf32>
    %20 = math.exp %19 : vector<8x8xf32>
    %c0_13 = arith.constant 0 : index
    %c0_14 = arith.constant 0 : index
    %21 = vector.load %arg8[%c0_13, %c0_14] : memref<8x1xf32, #tpu.memory_space<vmem>>, vector<8x1xf32>
    %22 = arith.mulf %17, %21 : vector<8x1xf32>
    %cst_15 = arith.constant dense<0.000000e+00> : vector<8xf32>
    %23 = vector.multi_reduction <add>, %20, %cst_15 [1] : vector<8x8xf32> to vector<8xf32>
    %24 = vector.shape_cast %23 : vector<8xf32> to vector<8x1xf32>
    %25 = arith.addf %22, %24 : vector<8x1xf32>
    %c0_16 = arith.constant 0 : index
    %c0_17 = arith.constant 0 : index
    %26 = vector.load %arg8[%c0_16, %c0_17] : memref<8x1xf32, #tpu.memory_space<vmem>>, vector<8x1xf32>
    tpu.vector_store %arg8[%c0_16, %c0_17], %25 {strides = array<i32>} : memref<8x1xf32, #tpu.memory_space<vmem>>, vector<8x1xf32>,
    %c0_18 = arith.constant 0 : index
    %c0_19 = arith.constant 0 : index
    %27 = vector.load %arg9[%c0_18, %c0_19] : memref<8x8xf32, #tpu.memory_space<vmem>>, vector<8x8xf32>
    %28 = vector.broadcast %17 : vector<8x1xf32> to vector<8x8xf32>
    %29 = arith.mulf %28, %27 : vector<8x8xf32>
    %30 = arith.truncf %20 : vector<8x8xf32> to vector<8x8xbf16>
    %cst_20 = arith.constant dense<0.000000e+00> : vector<8x8xf32>
    %31 = tpu.matmul %30, %10, %cst_20 {dimension_numbers = #tpu.dot_dimension_numbers<[1], [0], [0], [1], [0, 0, 1, 1], [], []>} : vector<8x8xbf16>, vector<8x8xbf16>, vector<8x8xf32> -> vector<8x8xf32>
    %32 = arith.addf %29, %31 : vector<8x8xf32>
    %c0_21 = arith.constant 0 : index
    %c0_22 = arith.constant 0 : index
    %33 = vector.load %arg9[%c0_21, %c0_22] : memref<8x8xf32, #tpu.memory_space<vmem>>, vector<8x8xf32>
    tpu.vector_store %arg9[%c0_21, %c0_22], %32 {strides = array<i32>} : memref<8x8xf32, #tpu.memory_space<vmem>>, vector<8x8xf32>,
    %c0_23 = arith.constant 0 : index
    %c0_24 = arith.constant 0 : index
    %34 = vector.load %arg7[%c0_23, %c0_24] : memref<8x1xf32, #tpu.memory_space<vmem>>, vector<8x1xf32>
    tpu.vector_store %arg7[%c0_23, %c0_24], %15 {strides = array<i32>} : memref<8x1xf32, #tpu.memory_space<vmem>>, vector<8x1xf32>,
    %c1_i32 = arith.constant 1 : i32
    %35 = arith.cmpi eq, %arg2, %c1_i32 : i32
    %36 = arith.extui %35 : i1 to i32
    %c0_i32_25 = arith.constant 0 : i32
    %37 = arith.cmpi ne, %36, %c0_i32_25 : i32
    scf.if %37 {
      %c0_26 = arith.constant 0 : index
      %c0_27 = arith.constant 0 : index
      %38 = vector.load %arg8[%c0_26, %c0_27] : memref<8x1xf32, #tpu.memory_space<vmem>>, vector<8x1xf32>
      %39 = tpu.reciprocal %38 {approx = true} : vector<8x1xf32> -> vector<8x1xf32>
      %c0_28 = arith.constant 0 : index
      %c0_29 = arith.constant 0 : index
      %40 = vector.load %arg9[%c0_28, %c0_29] : memref<8x8xf32, #tpu.memory_space<vmem>>, vector<8x8xf32>
      %41 = vector.broadcast %39 : vector<8x1xf32> to vector<8x8xf32>
      %42 = arith.mulf %40, %41 : vector<8x8xf32>
      %43 = arith.truncf %42 : vector<8x8xf32> to vector<8x8xbf16>
      %c0_30 = arith.constant 0 : index
      %c0_31 = arith.constant 0 : index
      %c0_32 = arith.constant 0 : index
      %44 = vector.load %arg6[%c0_30, %c0_31, %c0_32] : memref<1x8x8xbf16, #tpu.memory_space<vmem>>, vector<1x8x8xbf16>
      %45 = vector.shape_cast %44 : vector<1x8x8xbf16> to vector<8x8xbf16>
      %46 = vector.shape_cast %43 : vector<8x8xbf16> to vector<1x8x8xbf16>
      tpu.vector_store %arg6[%c0_30, %c0_31, %c0_32], %46 {strides = array<i32>} : memref<1x8x8xbf16, #tpu.memory_space<vmem>>, vector<1x8x8xbf16>,
    } else {
    }
    return
  }
  func.func @transform_0(%arg0: i32, %arg1: i32, %arg2: i32) -> (i32, i32, i32) {
    %c0_i32 = arith.constant 0 : i32
    %c0_i32_0 = arith.constant 0 : i32
    return %arg0, %arg1, %c0_i32 : i32, i32, i32
  }
  func.func @transform_1(%arg0: i32, %arg1: i32, %arg2: i32) -> (i32, i32, i32) {
    %c0_i32 = arith.constant 0 : i32
    %c0_i32_0 = arith.constant 0 : i32
    return %arg0, %arg2, %c0_i32 : i32, i32, i32
  }
  func.func @transform_2(%arg0: i32, %arg1: i32, %arg2: i32) -> (i32, i32, i32) {
    %c0_i32 = arith.constant 0 : i32
    %c0_i32_0 = arith.constant 0 : i32
    return %arg0, %arg2, %c0_i32 : i32, i32, i32
  }
  func.func @transform_3(%arg0: i32, %arg1: i32, %arg2: i32) -> (i32, i32, i32) {
    %c0_i32 = arith.constant 0 : i32
    %c0_i32_0 = arith.constant 0 : i32
    return %arg0, %arg1, %c0_i32 : i32, i32, i32
  }
}

module attributes {stable_mosaic.version = 11 : i64} {
  func.func @post_attn_kernel(%arg0: i32, %arg1: memref<8x32xbf16, #tpu.memory_space<vmem>>, %arg2: memref<8x32xbf16, #tpu.memory_space<vmem>>, %arg3: memref<32x32xbf16, #tpu.memory_space<vmem>>, %arg4: memref<1x32xf32, #tpu.memory_space<vmem>>, %arg5: memref<1x32xf32, #tpu.memory_space<vmem>>, %arg6: memref<1x32xf32, #tpu.memory_space<vmem>>, %arg7: memref<32x64xbf16, #tpu.memory_space<vmem>>, %arg8: memref<1x64xf32, #tpu.memory_space<vmem>>, %arg9: memref<64x32xbf16, #tpu.memory_space<vmem>>, %arg10: memref<1x32xf32, #tpu.memory_space<vmem>>, %arg11: memref<1x32xf32, #tpu.memory_space<vmem>>, %arg12: memref<1x32xf32, #tpu.memory_space<vmem>>, %arg13: memref<8x32xbf16, #tpu.memory_space<vmem>>) attributes {dimension_semantics = [#tpu.dimension_semantics<parallel>], iteration_bounds = array<i64: 4>, scalar_prefetch = 0 : i64, scratch_operands = 0 : i64, tpu.core_type = #tpu.core_type<tc>, window_params = [{transform_indices = @transform_0, window_bounds = array<i64: 8, 32>}, {transform_indices = @transform_1, window_bounds = array<i64: 8, 32>}, {pipeline_mode = #tpu.pipeline_mode<synchronous>, transform_indices = @transform_2, window_bounds = array<i64: 32, 32>}, {pipeline_mode = #tpu.pipeline_mode<synchronous>, transform_indices = @transform_3, window_bounds = array<i64: 1, 32>}, {pipeline_mode = #tpu.pipeline_mode<synchronous>, transform_indices = @transform_4, window_bounds = array<i64: 1, 32>}, {pipeline_mode = #tpu.pipeline_mode<synchronous>, transform_indices = @transform_5, window_bounds = array<i64: 1, 32>}, {pipeline_mode = #tpu.pipeline_mode<synchronous>, transform_indices = @transform_6, window_bounds = array<i64: 32, 64>}, {pipeline_mode = #tpu.pipeline_mode<synchronous>, transform_indices = @transform_7, window_bounds = array<i64: 1, 64>}, {pipeline_mode = #tpu.pipeline_mode<synchronous>, transform_indices = @transform_8, window_bounds = array<i64: 64, 32>}, {pipeline_mode = #tpu.pipeline_mode<synchronous>, transform_indices = @transform_9, window_bounds = array<i64: 1, 32>}, {pipeline_mode = #tpu.pipeline_mode<synchronous>, transform_indices = @transform_10, window_bounds = array<i64: 1, 32>}, {pipeline_mode = #tpu.pipeline_mode<synchronous>, transform_indices = @transform_11, window_bounds = array<i64: 1, 32>}, {transform_indices = @transform_12, window_bounds = array<i64: 8, 32>}]} {
    %c0 = arith.constant 0 : index
    %c0_0 = arith.constant 0 : index
    %0 = vector.load %arg2[%c0, %c0_0] : memref<8x32xbf16, #tpu.memory_space<vmem>>, vector<8x32xbf16>
    %1 = arith.extf %0 : vector<8x32xbf16> to vector<8x32xf32>
    %c0_1 = arith.constant 0 : index
    %c0_2 = arith.constant 0 : index
    %2 = vector.load %arg1[%c0_1, %c0_2] : memref<8x32xbf16, #tpu.memory_space<vmem>>, vector<8x32xbf16>
    %c0_3 = arith.constant 0 : index
    %c0_4 = arith.constant 0 : index
    %3 = vector.load %arg3[%c0_3, %c0_4] : memref<32x32xbf16, #tpu.memory_space<vmem>>, vector<32x32xbf16>
    %cst = arith.constant dense<0.000000e+00> : vector<8x32xf32>
    %4 = tpu.matmul %2, %3, %cst {dimension_numbers = #tpu.dot_dimension_numbers<[1], [0], [0], [1], [0, 0, 1, 1], [], []>} : vector<8x32xbf16>, vector<32x32xbf16>, vector<8x32xf32> -> vector<8x32xf32>
    %c0_5 = arith.constant 0 : index
    %c0_6 = arith.constant 0 : index
    %5 = vector.load %arg4[%c0_5, %c0_6] : memref<1x32xf32, #tpu.memory_space<vmem>>, vector<1x32xf32>
    %6 = vector.broadcast %5 : vector<1x32xf32> to vector<8x32xf32>
    %7 = arith.addf %4, %6 : vector<8x32xf32>
    %8 = arith.addf %7, %1 : vector<8x32xf32>
    %c0_7 = arith.constant 0 : index
    %c0_8 = arith.constant 0 : index
    %9 = vector.load %arg5[%c0_7, %c0_8] : memref<1x32xf32, #tpu.memory_space<vmem>>, vector<1x32xf32>
    %c0_9 = arith.constant 0 : index
    %c0_10 = arith.constant 0 : index
    %10 = vector.load %arg6[%c0_9, %c0_10] : memref<1x32xf32, #tpu.memory_space<vmem>>, vector<1x32xf32>
    %cst_11 = arith.constant dense<0.000000e+00> : vector<8xf32>
    %11 = vector.multi_reduction <add>, %8, %cst_11 [1] : vector<8x32xf32> to vector<8xf32>
    %12 = vector.shape_cast %11 : vector<8xf32> to vector<8x1xf32>
    %cst_12 = arith.constant 3.200000e+01 : f32
    %13 = vector.broadcast %cst_12 : f32 to vector<8x1xf32>
    %14 = arith.divf %12, %13 : vector<8x1xf32>
    %15 = vector.broadcast %14 : vector<8x1xf32> to vector<8x32xf32>
    %16 = arith.subf %8, %15 : vector<8x32xf32>
    %17 = arith.mulf %16, %16 : vector<8x32xf32>
    %cst_13 = arith.constant dense<0.000000e+00> : vector<8xf32>
    %18 = vector.multi_reduction <add>, %17, %cst_13 [1] : vector<8x32xf32> to vector<8xf32>
    %19 = vector.shape_cast %18 : vector<8xf32> to vector<8x1xf32>
    %cst_14 = arith.constant 3.200000e+01 : f32
    %20 = vector.broadcast %cst_14 : f32 to vector<8x1xf32>
    %21 = arith.divf %19, %20 : vector<8x1xf32>
    %22 = vector.broadcast %14 : vector<8x1xf32> to vector<8x32xf32>
    %23 = arith.subf %8, %22 : vector<8x32xf32>
    %cst_15 = arith.constant 9.99999996E-13 : f32
    %24 = vector.broadcast %cst_15 : f32 to vector<8x1xf32>
    %25 = arith.addf %21, %24 : vector<8x1xf32>
    %26 = math.rsqrt %25 : vector<8x1xf32>
    %27 = vector.broadcast %26 : vector<8x1xf32> to vector<8x32xf32>
    %28 = arith.mulf %23, %27 : vector<8x32xf32>
    %29 = vector.broadcast %9 : vector<1x32xf32> to vector<8x32xf32>
    %30 = arith.mulf %28, %29 : vector<8x32xf32>
    %31 = vector.broadcast %10 : vector<1x32xf32> to vector<8x32xf32>
    %32 = arith.addf %30, %31 : vector<8x32xf32>
    %33 = arith.truncf %32 : vector<8x32xf32> to vector<8x32xbf16>
    %c0_16 = arith.constant 0 : index
    %c0_17 = arith.constant 0 : index
    %34 = vector.load %arg7[%c0_16, %c0_17] : memref<32x64xbf16, #tpu.memory_space<vmem>>, vector<32x64xbf16>
    %cst_18 = arith.constant dense<0.000000e+00> : vector<8x64xf32>
    %35 = tpu.matmul %33, %34, %cst_18 {dimension_numbers = #tpu.dot_dimension_numbers<[1], [0], [0], [1], [0, 0, 1, 1], [], []>} : vector<8x32xbf16>, vector<32x64xbf16>, vector<8x64xf32> -> vector<8x64xf32>
    %c0_19 = arith.constant 0 : index
    %c0_20 = arith.constant 0 : index
    %36 = vector.load %arg8[%c0_19, %c0_20] : memref<1x64xf32, #tpu.memory_space<vmem>>, vector<1x64xf32>
    %37 = vector.broadcast %36 : vector<1x64xf32> to vector<8x64xf32>
    %38 = arith.addf %35, %37 : vector<8x64xf32>
    %cst_21 = arith.constant 0.636619746 : f32
    %39 = math.sqrt %cst_21 : f32
    %cst_22 = arith.constant 5.000000e-01 : f32
    %40 = vector.broadcast %cst_22 : f32 to vector<8x64xf32>
    %41 = arith.mulf %40, %38 : vector<8x64xf32>
    %cst_23 = arith.constant 4.471500e-02 : f32
    %42 = vector.broadcast %cst_23 : f32 to vector<8x64xf32>
    %43 = arith.mulf %42, %38 : vector<8x64xf32>
    %44 = arith.mulf %43, %38 : vector<8x64xf32>
    %45 = arith.mulf %44, %38 : vector<8x64xf32>
    %46 = arith.addf %38, %45 : vector<8x64xf32>
    %47 = vector.broadcast %39 : f32 to vector<8x64xf32>
    %48 = arith.mulf %47, %46 : vector<8x64xf32>
    %49 = math.tanh %48 : vector<8x64xf32>
    %cst_24 = arith.constant 1.000000e+00 : f32
    %50 = vector.broadcast %cst_24 : f32 to vector<8x64xf32>
    %51 = arith.addf %50, %49 : vector<8x64xf32>
    %52 = arith.mulf %41, %51 : vector<8x64xf32>
    %53 = arith.truncf %52 : vector<8x64xf32> to vector<8x64xbf16>
    %c0_25 = arith.constant 0 : index
    %c0_26 = arith.constant 0 : index
    %54 = vector.load %arg9[%c0_25, %c0_26] : memref<64x32xbf16, #tpu.memory_space<vmem>>, vector<64x32xbf16>
    %cst_27 = arith.constant dense<0.000000e+00> : vector<8x32xf32>
    %55 = tpu.matmul %53, %54, %cst_27 {dimension_numbers = #tpu.dot_dimension_numbers<[1], [0], [0], [1], [0, 0, 1, 1], [], []>} : vector<8x64xbf16>, vector<64x32xbf16>, vector<8x32xf32> -> vector<8x32xf32>
    %c0_28 = arith.constant 0 : index
    %c0_29 = arith.constant 0 : index
    %56 = vector.load %arg10[%c0_28, %c0_29] : memref<1x32xf32, #tpu.memory_space<vmem>>, vector<1x32xf32>
    %57 = vector.broadcast %56 : vector<1x32xf32> to vector<8x32xf32>
    %58 = arith.addf %55, %57 : vector<8x32xf32>
    %59 = arith.addf %58, %32 : vector<8x32xf32>
    %c0_30 = arith.constant 0 : index
    %c0_31 = arith.constant 0 : index
    %60 = vector.load %arg11[%c0_30, %c0_31] : memref<1x32xf32, #tpu.memory_space<vmem>>, vector<1x32xf32>
    %c0_32 = arith.constant 0 : index
    %c0_33 = arith.constant 0 : index
    %61 = vector.load %arg12[%c0_32, %c0_33] : memref<1x32xf32, #tpu.memory_space<vmem>>, vector<1x32xf32>
    %cst_34 = arith.constant dense<0.000000e+00> : vector<8xf32>
    %62 = vector.multi_reduction <add>, %59, %cst_34 [1] : vector<8x32xf32> to vector<8xf32>
    %63 = vector.shape_cast %62 : vector<8xf32> to vector<8x1xf32>
    %cst_35 = arith.constant 3.200000e+01 : f32
    %64 = vector.broadcast %cst_35 : f32 to vector<8x1xf32>
    %65 = arith.divf %63, %64 : vector<8x1xf32>
    %66 = vector.broadcast %65 : vector<8x1xf32> to vector<8x32xf32>
    %67 = arith.subf %59, %66 : vector<8x32xf32>
    %68 = arith.mulf %67, %67 : vector<8x32xf32>
    %cst_36 = arith.constant dense<0.000000e+00> : vector<8xf32>
    %69 = vector.multi_reduction <add>, %68, %cst_36 [1] : vector<8x32xf32> to vector<8xf32>
    %70 = vector.shape_cast %69 : vector<8xf32> to vector<8x1xf32>
    %cst_37 = arith.constant 3.200000e+01 : f32
    %71 = vector.broadcast %cst_37 : f32 to vector<8x1xf32>
    %72 = arith.divf %70, %71 : vector<8x1xf32>
    %73 = vector.broadcast %65 : vector<8x1xf32> to vector<8x32xf32>
    %74 = arith.subf %59, %73 : vector<8x32xf32>
    %cst_38 = arith.constant 9.99999996E-13 : f32
    %75 = vector.broadcast %cst_38 : f32 to vector<8x1xf32>
    %76 = arith.addf %72, %75 : vector<8x1xf32>
    %77 = math.rsqrt %76 : vector<8x1xf32>
    %78 = vector.broadcast %77 : vector<8x1xf32> to vector<8x32xf32>
    %79 = arith.mulf %74, %78 : vector<8x32xf32>
    %80 = vector.broadcast %60 : vector<1x32xf32> to vector<8x32xf32>
    %81 = arith.mulf %79, %80 : vector<8x32xf32>
    %82 = vector.broadcast %61 : vector<1x32xf32> to vector<8x32xf32>
    %83 = arith.addf %81, %82 : vector<8x32xf32>
    %84 = arith.truncf %83 : vector<8x32xf32> to vector<8x32xbf16>
    %c0_39 = arith.constant 0 : index
    %c0_40 = arith.constant 0 : index
    %85 = vector.load %arg13[%c0_39, %c0_40] : memref<8x32xbf16, #tpu.memory_space<vmem>>, vector<8x32xbf16>
    tpu.vector_store %arg13[%c0_39, %c0_40], %84 {strides = array<i32>} : memref<8x32xbf16, #tpu.memory_space<vmem>>, vector<8x32xbf16>,
    return
  }
  func.func @transform_0(%arg0: i32) -> (i32, i32) {
    %c0_i32 = arith.constant 0 : i32
    %c0_i32_0 = arith.constant 0 : i32
    return %arg0, %c0_i32 : i32, i32
  }
  func.func @transform_1(%arg0: i32) -> (i32, i32) {
    %c0_i32 = arith.constant 0 : i32
    %c0_i32_0 = arith.constant 0 : i32
    return %arg0, %c0_i32 : i32, i32
  }
  func.func @transform_2(%arg0: i32) -> (i32, i32) {
    %c0_i32 = arith.constant 0 : i32
    %c0_i32_0 = arith.constant 0 : i32
    %c0_i32_1 = arith.constant 0 : i32
    return %c0_i32, %c0_i32_0 : i32, i32
  }
  func.func @transform_3(%arg0: i32) -> (i32, i32) {
    %c0_i32 = arith.constant 0 : i32
    %c0_i32_0 = arith.constant 0 : i32
    %c0_i32_1 = arith.constant 0 : i32
    return %c0_i32, %c0_i32_0 : i32, i32
  }
  func.func @transform_4(%arg0: i32) -> (i32, i32) {
    %c0_i32 = arith.constant 0 : i32
    %c0_i32_0 = arith.constant 0 : i32
    %c0_i32_1 = arith.constant 0 : i32
    return %c0_i32, %c0_i32_0 : i32, i32
  }
  func.func @transform_5(%arg0: i32) -> (i32, i32) {
    %c0_i32 = arith.constant 0 : i32
    %c0_i32_0 = arith.constant 0 : i32
    %c0_i32_1 = arith.constant 0 : i32
    return %c0_i32, %c0_i32_0 : i32, i32
  }
  func.func @transform_6(%arg0: i32) -> (i32, i32) {
    %c0_i32 = arith.constant 0 : i32
    %c0_i32_0 = arith.constant 0 : i32
    %c0_i32_1 = arith.constant 0 : i32
    return %c0_i32, %c0_i32_0 : i32, i32
  }
  func.func @transform_7(%arg0: i32) -> (i32, i32) {
    %c0_i32 = arith.constant 0 : i32
    %c0_i32_0 = arith.constant 0 : i32
    %c0_i32_1 = arith.constant 0 : i32
    return %c0_i32, %c0_i32_0 : i32, i32
  }
  func.func @transform_8(%arg0: i32) -> (i32, i32) {
    %c0_i32 = arith.constant 0 : i32
    %c0_i32_0 = arith.constant 0 : i32
    %c0_i32_1 = arith.constant 0 : i32
    return %c0_i32, %c0_i32_0 : i32, i32
  }
  func.func @transform_9(%arg0: i32) -> (i32, i32) {
    %c0_i32 = arith.constant 0 : i32
    %c0_i32_0 = arith.constant 0 : i32
    %c0_i32_1 = arith.constant 0 : i32
    return %c0_i32, %c0_i32_0 : i32, i32
  }
  func.func @transform_10(%arg0: i32) -> (i32, i32) {
    %c0_i32 = arith.constant 0 : i32
    %c0_i32_0 = arith.constant 0 : i32
    %c0_i32_1 = arith.constant 0 : i32
    return %c0_i32, %c0_i32_0 : i32, i32
  }
  func.func @transform_11(%arg0: i32) -> (i32, i32) {
    %c0_i32 = arith.constant 0 : i32
    %c0_i32_0 = arith.constant 0 : i32
    %c0_i32_1 = arith.constant 0 : i32
    return %c0_i32, %c0_i32_0 : i32, i32
  }
  func.func @transform_12(%arg0: i32) -> (i32, i32) {
    %c0_i32 = arith.constant 0 : i32
    %c0_i32_0 = arith.constant 0 : i32
    return %arg0, %c0_i32 : i32, i32
  }
}

</mosaic_0001>

<llo_original>
// kernel: bert_classifier_forward.6
$region0: #{bert_classifier_forward.6}
  #allocation0 [shape = 'u32[]', space=smem, size = 0x4, offset = 0x4, fixed_abs, tag = 'smem constant byte address 0x4 - core index']
  #allocation1 [shape = 'u32[72,128]{1,0:T(1,128)}', space=vmem, size = 0x9000, scoped, tag = 'internal scratch']
  %s0 = inlined_call_operand.vmem [shape: bf16[32,32], index: 0, kind: input, shape index: {}]
  %s1 = inlined_call_operand.vmem [shape: bf16[32,96], index: 1, kind: input, shape index: {}]
  %s2 = inlined_call_operand.vmem [shape: f32[1,96], index: 2, kind: input, shape index: {}]
  %s3 = inlined_call_operand.vmem [shape: bf16[32,96], index: 3, kind: output, shape index: {}]
  %s4 = sld [smem:[#allocation0]]
  $region45: #{bert_classifier_forward.6} parent=0
    _
  %s6 = ssub.s32 1, %s4
  %s7 = scalar_select 0, %s6, %s4
  loop: start=0, step=1, limit=6
  $region2: #{bert_classifier_forward.6} parent=0 // loop_pre_header
    _
  $region3: #{bert_classifier_forward.6} parent=0 // loop_header
    %s9 = sphi 0, %s13
    %p10 = scmp.ge.s32.totalorder %s9, 6
    %s19 = sphi 0, %s21
    %s22 = sphi 0, %s19
    %s23 = sphi 0, %s22
    %s39 = sphi 0, %s23
    %s43 = sphi 0, %s43
    %s45 = sphi 0, %s43
    %s46 = sphi 0, %s45
    %s60 = sphi 0, %s46
    %s64 = sphi 0, %s64
    %s66 = sphi 0, %s64
    %s67 = sphi 0, %s66
    %s81 = sphi 0, %s67
    %s87 = sphi 0, %s89
    %s90 = sphi 0, %s87
    %s91 = sphi 0, %s90
    %s107 = sphi 0, %s91
  $region4: #{bert_classifier_forward.6} parent=0 // loop_header_branch
    %12 = sbr.rel (%p10) target = $region8
  $region5: #{bert_classifier_forward.6} parent=0 // loop_body
    %s14 = ssub.s32 %s9, 1
    %s15 = ssub.s32 %s9, 2
    %s16 = sadd.s32 %s9, 1
    %s17 = ssub.s32 %s9, %s16
    %p18 = scmp.eq.s32.totalorder %s17, 0
    %s20 = sadd.s32 %s19, 1
    %s21 = scalar_select %p18, %s19, %s20
    %p24 = pneg %p18
    %p25 = scmp.eq.s32.totalorder %s9, 3
    %p26 = por %p24, %p25
    %p27 = scmp.ne.s32.totalorder %s19, %s22
    %p28 = scmp.eq.s32.totalorder %s9, 0
    %p29 = por %p27, %p28
    %p30 = scmp.ne.s32.totalorder %s19, %s22
    %p31 = scmp.eq.s32.totalorder %s14, 3
    %p32 = por %p30, %p31
    %p33 = scmp.ne.s32.totalorder %s22, %s23
    %p34 = scmp.eq.s32.totalorder %s14, 0
    %p35 = por %p33, %p34
    %p36 = scmp.ne.s32.totalorder %s22, %s23
    %p37 = scmp.eq.s32.totalorder %s15, 3
    %p38 = por %p36, %p37
    %p40 = scmp.ne.s32.totalorder %s23, %s39
    %p41 = scmp.eq.s32.totalorder %s15, 0
    %p42 = por %p40, %p41
    %s44 = sadd.s32 %s43, 1
    %p47 = scmp.eq.s32.totalorder %s9, 3
    %p48 = scmp.ne.s32.totalorder %s43, %s45
    %p49 = scmp.eq.s32.totalorder %s9, 0
    %p50 = por %p48, %p49
    %p51 = scmp.ne.s32.totalorder %s43, %s45
    %p52 = scmp.eq.s32.totalorder %s14, 3
    %p53 = por %p51, %p52
    %p54 = scmp.ne.s32.totalorder %s45, %s46
    %p55 = scmp.eq.s32.totalorder %s14, 0
    %p56 = por %p54, %p55
    %p57 = scmp.ne.s32.totalorder %s45, %s46
    %p58 = scmp.eq.s32.totalorder %s15, 3
    %p59 = por %p57, %p58
    %p61 = scmp.ne.s32.totalorder %s46, %s60
    %p62 = scmp.eq.s32.totalorder %s15, 0
    %p63 = por %p61, %p62
    %s65 = sadd.s32 %s64, 1
    %p68 = scmp.eq.s32.totalorder %s9, 3
    %p69 = scmp.ne.s32.totalorder %s64, %s66
    %p70 = scmp.eq.s32.totalorder %s9, 0
    %p71 = por %p69, %p70
    %p72 = scmp.ne.s32.totalorder %s64, %s66
    %p73 = scmp.eq.s32.totalorder %s14, 3
    %p74 = por %p72, %p73
    %p75 = scmp.ne.s32.totalorder %s66, %s67
    %p76 = scmp.eq.s32.totalorder %s14, 0
    %p77 = por %p75, %p76
    %p78 = scmp.ne.s32.totalorder %s66, %s67
    %p79 = scmp.eq.s32.totalorder %s15, 3
    %p80 = por %p78, %p79
    %p82 = scmp.ne.s32.totalorder %s67, %s81
    %p83 = scmp.eq.s32.totalorder %s15, 0
    %p84 = por %p82, %p83
    %s85 = ssub.s32 %s9, %s16
    %p86 = scmp.eq.s32.totalorder %s85, 0
    %s88 = sadd.s32 %s87, 1
    %s89 = scalar_select %p86, %s87, %s88
    %p92 = pneg %p86
    %p93 = scmp.eq.s32.totalorder %s9, 3
    %p94 = por %p92, %p93
    %p95 = scmp.ne.s32.totalorder %s87, %s90
    %p96 = scmp.eq.s32.totalorder %s9, 0
    %p97 = por %p95, %p96
    %p98 = scmp.ne.s32.totalorder %s87, %s90
    %p99 = scmp.eq.s32.totalorder %s14, 3
    %p100 = por %p98, %p99
    %p101 = scmp.ne.s32.totalorder %s90, %s91
    %p102 = scmp.eq.s32.totalorder %s14, 0
    %p103 = por %p101, %p102
    %p104 = scmp.ne.s32.totalorder %s90, %s91
    %p105 = scmp.eq.s32.totalorder %s15, 3
    %p106 = por %p104, %p105
    %p108 = scmp.ne.s32.totalorder %s91, %s107
    %p109 = scmp.eq.s32.totalorder %s15, 0
    %p110 = por %p108, %p109
    %p111 = scmp.le.s32.totalorder 1, %s9
    %p112 = scmp.lt.s32.totalorder %s9, 5
    %p113 = pnand %p111, %p112
    %p114 = pneg %p113
    // Predicated region
    $region9: #{bert_classifier_forward.6} parent=5 // pred_check
      _
    $region10: #{bert_classifier_forward.6} parent=5 // pred_check_branch
      %116 = sbr.rel (%p113) target = $region12
    $region11: #{bert_classifier_forward.6} parent=5 // pred_region
      %s117 = ssub.s32 %s9, 1
      // Predicated region
      $region13: #{bert_classifier_forward.6} parent=11 // pred_check
        %p118 = pneg %p56
      $region14: #{bert_classifier_forward.6} parent=11 // pred_check_branch
        %120 = sbr.rel (%p118) target = $region16
      $region15: #{bert_classifier_forward.6} parent=11 // pred_region
        _
      $region16: #{bert_classifier_forward.6} parent=11 // pred_fallthru
        _
      // Predicated region
      $region17: #{bert_classifier_forward.6} parent=11 // pred_check
        %p121 = pneg %p77
      $region18: #{bert_classifier_forward.6} parent=11 // pred_check_branch
        %123 = sbr.rel (%p121) target = $region20
      $region19: #{bert_classifier_forward.6} parent=11 // pred_region
        _
      $region20: #{bert_classifier_forward.6} parent=11 // pred_fallthru
        _
    $region12: #{bert_classifier_forward.6} parent=5 // pred_fallthru
      _
    %p124 = scmp.lt.s32.totalorder %s9, 4
    // Predicated region
    $region21: #{bert_classifier_forward.6} parent=5 // pred_check
      %p125 = pneg %p124
    $region22: #{bert_classifier_forward.6} parent=5 // pred_check_branch
      %127 = sbr.rel (%p125) target = $region24
    $region23: #{bert_classifier_forward.6} parent=5 // pred_region
      // Predicated region
      $region25: #{bert_classifier_forward.6} parent=23 // pred_check
        %p128 = pneg %p29
      $region26: #{bert_classifier_forward.6} parent=23 // pred_check_branch
        %130 = sbr.rel (%p128) target = $region28
      $region27: #{bert_classifier_forward.6} parent=23 // pred_region
        %p131 = scmp.lt.s32.totalorder %s9, 3
        %s132 = scalar_select %p131, %s9, 3
        %s133 = smul.addr %s132, 4
        %s134 = scalar_lea.vmem %s0, %s133
      $region28: #{bert_classifier_forward.6} parent=23 // pred_fallthru
        _
    $region24: #{bert_classifier_forward.6} parent=5 // pred_fallthru
      _
    %p135 = scmp.le.s32.totalorder 1, %s9
    %p136 = scmp.lt.s32.totalorder %s9, 5
    %p137 = pnand %p135, %p136
    %p138 = pneg %p137
    // Predicated region
    $region29: #{bert_classifier_forward.6} parent=5 // pred_check
      _
    $region30: #{bert_classifier_forward.6} parent=5 // pred_check_branch
      %140 = sbr.rel (%p137) target = $region32
    $region31: #{bert_classifier_forward.6} parent=5 // pred_region
      %s141 = ssub.s32 %s9, 1
      %p142 = scmp.lt.s32.totalorder %s14, 3
      %s143 = scalar_select %p142, %s14, 3
      %s144 = smul.addr %s143, 4
      %s145 = scalar_lea.vmem %s0, %s144
      %p146 = pneg %p35
      %p147 = pneg %p32
      %p148 = pneg %p56
      %p149 = pneg %p53
      %p150 = pneg %p77
      %p151 = pneg %p74
      %p152 = pneg %p103
      %p153 = pneg %p100
      %p154 = scmp.lt.s32.totalorder %s14, 3
      %s155 = scalar_select %p154, %s14, 3
      %s156 = smul.addr %s155, 4
      %s157 = scalar_lea.vmem %s3, %s156
      %p158 = scmp.lt.s32.totalorder %s14, 3
      %s159 = scalar_select %p158, %s14, 3
      %s160 = smul.addr %s159, 4
      %s161 = scalar_lea.vmem %s0, %s160
      %p162 = scmp.lt.s32.totalorder %s14, 3
      %s163 = scalar_select %p162, %s14, 3
      %s164 = smul.addr %s163, 4
      %s165 = scalar_lea.vmem %s3, %s164
      %v167 = vld [vmem:[%s161] sm:$0xf]
      %v168 = vld [vmem:[%s1] sm:$0xf]
      %v169 = vld [vmem:[%s1 + $0x4] sm:$0xf]
      %v170 = vld [vmem:[%s1 + $0x8] sm:$0xf]
      %v171 = vld [vmem:[%s1 + $0xc] sm:$0xf]
      %v172 = vld [vmem:[%s2] sm:$0x1]
      %v174 = vperm.slane %v172, 0
      %v180 = vunpack.c.l.b16 %v168
      %v181 = vunpack.c.l.b16 %v169
      %v182 = vunpack.c.l.b16 %v170
      %v183 = vunpack.c.l.b16 %v171
      %v184 = vpack.c.b16 %v181, %v180
      %v185 = vpack.c.b16 %v183, %v182
      %vm188 = vcmask 261120
      %v190 = vsel %vm188, %v167, 0
      %192 = vmatpush.bf16.msra.mxu0 0
      %193 = vmatpush.bf16.msra.mxu0 0
      %194 = vmatpush.bf16.msra.mxu0 0
      %195 = vmatpush.bf16.msra.mxu0 0
      %196 = vmatpush.bf16.msra.mxu0 0
      %197 = vmatpush.bf16.msra.mxu0 0
      %198 = vmatpush.bf16.msra.mxu0 %v185
      %199 = vmatpush.bf16.msra.mxu0 %v184
      %200 = vmatmul.bf16.gmra.mxu0 %v190
      %v201 = vpop.f32.mrf.mxu0
      %v202 = vadd.f32 %v174, %v201
      %v203 = vpop.f32.mrf.mxu0
      %204 = vdwg.mxu0
      %v205 = vpack.c.bf16 %v202, %v202
      %vm206 = vcmask 781312
      %207 = vst.msk [vmem:[%s165] sm:$0xf] %vm206, %v205
      %p208 = scmp.lt.s32.totalorder %s14, 3
      %s209 = scalar_select %p208, %s14, 3
      %s210 = smul.addr %s209, 4
      %s211 = scalar_lea.vmem %s3, %s210
      // Predicated region
      $region33: #{bert_classifier_forward.6} parent=31 // pred_check
        %p212 = pneg %p100
      $region34: #{bert_classifier_forward.6} parent=31 // pred_check_branch
        %214 = sbr.rel (%p212) target = $region36
      $region35: #{bert_classifier_forward.6} parent=31 // pred_region
        _
      $region36: #{bert_classifier_forward.6} parent=31 // pred_fallthru
        _
    $region32: #{bert_classifier_forward.6} parent=5 // pred_fallthru
      _
    %p215 = scmp.le.s32.totalorder 2, %s9
    // Predicated region
    $region37: #{bert_classifier_forward.6} parent=5 // pred_check
      %p216 = pneg %p215
    $region38: #{bert_classifier_forward.6} parent=5 // pred_check_branch
      %218 = sbr.rel (%p216) target = $region40
    $region39: #{bert_classifier_forward.6} parent=5 // pred_region
      %s219 = ssub.s32 %s9, 2
      // Predicated region
      $region41: #{bert_classifier_forward.6} parent=39 // pred_check
        %p220 = pneg %p106
      $region42: #{bert_classifier_forward.6} parent=39 // pred_check_branch
        %222 = sbr.rel (%p220) target = $region44
      $region43: #{bert_classifier_forward.6} parent=39 // pred_region
        %p223 = scmp.lt.s32.totalorder %s15, 3
        %s224 = scalar_select %p223, %s15, 3
        %s225 = smul.addr %s224, 4
        %s226 = scalar_lea.vmem %s3, %s225
      $region44: #{bert_classifier_forward.6} parent=39 // pred_fallthru
        _
    $region40: #{bert_classifier_forward.6} parent=5 // pred_fallthru
      _
  $region6: #{bert_classifier_forward.6} parent=0 // loop_footer
    %s13 = sadd.s32 1, %s9
  $region7: #{bert_classifier_forward.6} parent=0 // loop_footer_branch
    %8 = sbr.rel target = $region3
  $region8: #{bert_classifier_forward.6} parent=0 // loop_exit
    _

// kernel: bert_classifier_forward.7
$region0: #{bert_classifier_forward.7}
  #allocation0 [shape = 'u32[]', space=smem, size = 0x4, offset = 0x4, fixed_abs, tag = 'smem constant byte address 0x4 - core index']
  #allocation1 [shape = 'u32[72,128]{1,0:T(1,128)}', space=vmem, size = 0x9000, scoped, tag = 'internal scratch']
  #allocation2 [shape = 'f32[8,1]{1,0:T(8,128)}', space=vmem, size = 0x1000, scoped, tag = 'scratch operand']
  #allocation3 [shape = 'f32[8,1]{1,0:T(8,128)}', space=vmem, size = 0x1000, scoped, tag = 'scratch operand']
  #allocation4 [shape = 'f32[8,8]{1,0:T(8,128)}', space=vmem, size = 0x1000, scoped, tag = 'scratch operand']
  %s0 = inlined_call_operand.vmem [shape: bf16[8,16,8], index: 0, kind: input, shape index: {}]
  %s1 = inlined_call_operand.vmem [shape: bf16[8,16,8], index: 1, kind: input, shape index: {}]
  %s2 = inlined_call_operand.vmem [shape: bf16[8,16,8], index: 2, kind: input, shape index: {}]
  %s3 = inlined_call_operand.vmem [shape: bf16[8,16,8], index: 3, kind: output, shape index: {}]
  %s4 = sld [smem:[#allocation0]]
  $region53: #{bert_classifier_forward.7} parent=0
    _
  %s6 = ssub.s32 1, %s4
  %s7 = scalar_select 0, %s6, %s4
  loop: start=0, step=1, limit=34
  $region2: #{bert_classifier_forward.7} parent=0 // loop_pre_header
    _
  $region3: #{bert_classifier_forward.7} parent=0 // loop_header
    %s9 = sphi 0, %s13
    %p10 = scmp.ge.s32.totalorder %s9, 34
    %s16 = sphi 0, %s35
    %s17 = sphi 0, %s31
    %s18 = sphi 0, %s27
    %s19 = sphi 0, %s16
    %s20 = sphi 0, %s17
    %s21 = sphi 0, %s18
    %s22 = sphi 0, %s19
    %s23 = sphi 0, %s20
    %s24 = sphi 0, %s21
    %s40 = sphi 0, %s42
    %s43 = sphi 0, %s40
    %s44 = sphi 0, %s43
    %s60 = sphi 0, %s44
    %s68 = sphi 0, %s70
    %s71 = sphi 0, %s68
    %s72 = sphi 0, %s71
    %s88 = sphi 0, %s72
    %s96 = sphi 0, %s98
    %s99 = sphi 0, %s96
    %s100 = sphi 0, %s99
    %s116 = sphi 0, %s100
    %s124 = sphi 0, %s126
    %s127 = sphi 0, %s124
    %s128 = sphi 0, %s127
    %s144 = sphi 0, %s128
  $region4: #{bert_classifier_forward.7} parent=0 // loop_header_branch
    %12 = sbr.rel (%p10) target = $region8
  $region5: #{bert_classifier_forward.7} parent=0 // loop_body
    %s14 = ssub.s32 %s9, 1
    %s15 = ssub.s32 %s9, 2
    %s25 = sadd.s32 1, %s18
    %p26 = scmp.ge.s32.totalorder %s25, 2
    %s27 = scalar_select %p26, 0, %s25
    %s28 = sadd.s32 1, %s17
    %s29 = scalar_select %p26, %s28, %s17
    %p30 = scmp.ge.s32.totalorder %s29, 2
    %s31 = scalar_select %p30, 0, %s29
    %s32 = sadd.s32 1, %s16
    %s33 = scalar_select %p30, %s32, %s16
    %p34 = scmp.ge.s32.totalorder %s33, 8
    %s35 = scalar_select %p34, 0, %s33
    %s36 = ssub.s32 %s16, %s35
    %s37 = ssub.s32 %s17, %s31
    %s38 = sor.u32 %s36, %s37
    %p39 = scmp.eq.s32.totalorder %s38, 0
    %s41 = sadd.s32 %s40, 1
    %s42 = scalar_select %p39, %s40, %s41
    %p45 = pneg %p39
    %p46 = scmp.eq.s32.totalorder %s9, 31
    %p47 = por %p45, %p46
    %p48 = scmp.ne.s32.totalorder %s40, %s43
    %p49 = scmp.eq.s32.totalorder %s9, 0
    %p50 = por %p48, %p49
    %p51 = scmp.ne.s32.totalorder %s40, %s43
    %p52 = scmp.eq.s32.totalorder %s14, 31
    %p53 = por %p51, %p52
    %p54 = scmp.ne.s32.totalorder %s43, %s44
    %p55 = scmp.eq.s32.totalorder %s14, 0
    %p56 = por %p54, %p55
    %p57 = scmp.ne.s32.totalorder %s43, %s44
    %p58 = scmp.eq.s32.totalorder %s15, 31
    %p59 = por %p57, %p58
    %p61 = scmp.ne.s32.totalorder %s44, %s60
    %p62 = scmp.eq.s32.totalorder %s15, 0
    %p63 = por %p61, %p62
    %s64 = ssub.s32 %s16, %s35
    %s65 = ssub.s32 %s18, %s27
    %s66 = sor.u32 %s64, %s65
    %p67 = scmp.eq.s32.totalorder %s66, 0
    %s69 = sadd.s32 %s68, 1
    %s70 = scalar_select %p67, %s68, %s69
    %p73 = pneg %p67
    %p74 = scmp.eq.s32.totalorder %s9, 31
    %p75 = por %p73, %p74
    %p76 = scmp.ne.s32.totalorder %s68, %s71
    %p77 = scmp.eq.s32.totalorder %s9, 0
    %p78 = por %p76, %p77
    %p79 = scmp.ne.s32.totalorder %s68, %s71
    %p80 = scmp.eq.s32.totalorder %s14, 31
    %p81 = por %p79, %p80
    %p82 = scmp.ne.s32.totalorder %s71, %s72
    %p83 = scmp.eq.s32.totalorder %s14, 0
    %p84 = por %p82, %p83
    %p85 = scmp.ne.s32.totalorder %s71, %s72
    %p86 = scmp.eq.s32.totalorder %s15, 31
    %p87 = por %p85, %p86
    %p89 = scmp.ne.s32.totalorder %s72, %s88
    %p90 = scmp.eq.s32.totalorder %s15, 0
    %p91 = por %p89, %p90
    %s92 = ssub.s32 %s16, %s35
    %s93 = ssub.s32 %s18, %s27
    %s94 = sor.u32 %s92, %s93
    %p95 = scmp.eq.s32.totalorder %s94, 0
    %s97 = sadd.s32 %s96, 1
    %s98 = scalar_select %p95, %s96, %s97
    %p101 = pneg %p95
    %p102 = scmp.eq.s32.totalorder %s9, 31
    %p103 = por %p101, %p102
    %p104 = scmp.ne.s32.totalorder %s96, %s99
    %p105 = scmp.eq.s32.totalorder %s9, 0
    %p106 = por %p104, %p105
    %p107 = scmp.ne.s32.totalorder %s96, %s99
    %p108 = scmp.eq.s32.totalorder %s14, 31
    %p109 = por %p107, %p108
    %p110 = scmp.ne.s32.totalorder %s99, %s100
    %p111 = scmp.eq.s32.totalorder %s14, 0
    %p112 = por %p110, %p111
    %p113 = scmp.ne.s32.totalorder %s99, %s100
    %p114 = scmp.eq.s32.totalorder %s15, 31
    %p115 = por %p113, %p114
    %p117 = scmp.ne.s32.totalorder %s100, %s116
    %p118 = scmp.eq.s32.totalorder %s15, 0
    %p119 = por %p117, %p118
    %s120 = ssub.s32 %s16, %s35
    %s121 = ssub.s32 %s17, %s31
    %s122 = sor.u32 %s120, %s121
    %p123 = scmp.eq.s32.totalorder %s122, 0
    %s125 = sadd.s32 %s124, 1
    %s126 = scalar_select %p123, %s124, %s125
    %p129 = pneg %p123
    %p130 = scmp.eq.s32.totalorder %s9, 31
    %p131 = por %p129, %p130
    %p132 = scmp.ne.s32.totalorder %s124, %s127
    %p133 = scmp.eq.s32.totalorder %s9, 0
    %p134 = por %p132, %p133
    %p135 = scmp.ne.s32.totalorder %s124, %s127
    %p136 = scmp.eq.s32.totalorder %s14, 31
    %p137 = por %p135, %p136
    %p138 = scmp.ne.s32.totalorder %s127, %s128
    %p139 = scmp.eq.s32.totalorder %s14, 0
    %p140 = por %p138, %p139
    %p141 = scmp.ne.s32.totalorder %s127, %s128
    %p142 = scmp.eq.s32.totalorder %s15, 31
    %p143 = por %p141, %p142
    %p145 = scmp.ne.s32.totalorder %s128, %s144
    %p146 = scmp.eq.s32.totalorder %s15, 0
    %p147 = por %p145, %p146
    %p148 = scmp.le.s32.totalorder 1, %s9
    %p149 = scmp.lt.s32.totalorder %s9, 33
    %p150 = pnand %p148, %p149
    %p151 = pneg %p150
    // Predicated region
    $region9: #{bert_classifier_forward.7} parent=5 // pred_check
      _
    $region10: #{bert_classifier_forward.7} parent=5 // pred_check_branch
      %153 = sbr.rel (%p150) target = $region12
    $region11: #{bert_classifier_forward.7} parent=5 // pred_region
      %s154 = ssub.s32 %s9, 1
    $region12: #{bert_classifier_forward.7} parent=5 // pred_fallthru
      _
    %p155 = scmp.lt.s32.totalorder %s9, 32
    // Predicated region
    $region13: #{bert_classifier_forward.7} parent=5 // pred_check
      %p156 = pneg %p155
    $region14: #{bert_classifier_forward.7} parent=5 // pred_check_branch
      %158 = sbr.rel (%p156) target = $region16
    $region15: #{bert_classifier_forward.7} parent=5 // pred_region
      // Predicated region
      $region17: #{bert_classifier_forward.7} parent=15 // pred_check
        %p159 = pneg %p50
      $region18: #{bert_classifier_forward.7} parent=15 // pred_check_branch
        %161 = sbr.rel (%p159) target = $region20
      $region19: #{bert_classifier_forward.7} parent=15 // pred_region
        %p162 = scmp.lt.s32.totalorder %s16, 7
        %s163 = scalar_select %p162, %s16, 7
        %p164 = scmp.lt.s32.totalorder %s17, 1
        %s165 = scalar_select %p164, %s17, 1
        %s166 = smul.addr %s163, 2
        %s167 = sadd.s32 %s165, %s166
        %s168 = smul.addr %s167, 4
        %s169 = scalar_lea.vmem %s0, %s168
      $region20: #{bert_classifier_forward.7} parent=15 // pred_fallthru
        _
      // Predicated region
      $region21: #{bert_classifier_forward.7} parent=15 // pred_check
        %p170 = pneg %p78
      $region22: #{bert_classifier_forward.7} parent=15 // pred_check_branch
        %172 = sbr.rel (%p170) target = $region24
      $region23: #{bert_classifier_forward.7} parent=15 // pred_region
        %p173 = scmp.lt.s32.totalorder %s16, 7
        %s174 = scalar_select %p173, %s16, 7
        %p175 = scmp.lt.s32.totalorder %s18, 1
        %s176 = scalar_select %p175, %s18, 1
        %s177 = smul.addr %s174, 2
        %s178 = sadd.s32 %s176, %s177
        %s179 = smul.addr %s178, 4
        %s180 = scalar_lea.vmem %s1, %s179
      $region24: #{bert_classifier_forward.7} parent=15 // pred_fallthru
        _
      // Predicated region
      $region25: #{bert_classifier_forward.7} parent=15 // pred_check
        %p181 = pneg %p106
      $region26: #{bert_classifier_forward.7} parent=15 // pred_check_branch
        %183 = sbr.rel (%p181) target = $region28
      $region27: #{bert_classifier_forward.7} parent=15 // pred_region
        %p184 = scmp.lt.s32.totalorder %s16, 7
        %s185 = scalar_select %p184, %s16, 7
        %p186 = scmp.lt.s32.totalorder %s18, 1
        %s187 = scalar_select %p186, %s18, 1
        %s188 = smul.addr %s185, 2
        %s189 = sadd.s32 %s187, %s188
        %s190 = smul.addr %s189, 4
        %s191 = scalar_lea.vmem %s2, %s190
      $region28: #{bert_classifier_forward.7} parent=15 // pred_fallthru
        _
    $region16: #{bert_classifier_forward.7} parent=5 // pred_fallthru
      _
    %p192 = scmp.le.s32.totalorder 1, %s9
    %p193 = scmp.lt.s32.totalorder %s9, 33
    %p194 = pnand %p192, %p193
    %p195 = pneg %p194
    // Predicated region
    $region29: #{bert_classifier_forward.7} parent=5 // pred_check
      _
    $region30: #{bert_classifier_forward.7} parent=5 // pred_check_branch
      %197 = sbr.rel (%p194) target = $region32
    $region31: #{bert_classifier_forward.7} parent=5 // pred_region
      %s198 = ssub.s32 %s9, 1
      %p199 = scmp.lt.s32.totalorder %s19, 7
      %s200 = scalar_select %p199, %s19, 7
      %p201 = scmp.lt.s32.totalorder %s20, 1
      %s202 = scalar_select %p201, %s20, 1
      %s203 = smul.addr %s200, 2
      %s204 = sadd.s32 %s202, %s203
      %s205 = smul.addr %s204, 4
      %s206 = scalar_lea.vmem %s0, %s205
      %p207 = pneg %p56
      %p208 = pneg %p53
      %p209 = scmp.lt.s32.totalorder %s19, 7
      %s210 = scalar_select %p209, %s19, 7
      %p211 = scmp.lt.s32.totalorder %s21, 1
      %s212 = scalar_select %p211, %s21, 1
      %s213 = smul.addr %s210, 2
      %s214 = sadd.s32 %s212, %s213
      %s215 = smul.addr %s214, 4
      %s216 = scalar_lea.vmem %s1, %s215
      %p217 = pneg %p84
      %p218 = pneg %p81
      %p219 = scmp.lt.s32.totalorder %s19, 7
      %s220 = scalar_select %p219, %s19, 7
      %p221 = scmp.lt.s32.totalorder %s21, 1
      %s222 = scalar_select %p221, %s21, 1
      %s223 = smul.addr %s220, 2
      %s224 = sadd.s32 %s222, %s223
      %s225 = smul.addr %s224, 4
      %s226 = scalar_lea.vmem %s2, %s225
      %p227 = pneg %p112
      %p228 = pneg %p109
      %p229 = pneg %p140
      %p230 = pneg %p137
      %p231 = scmp.lt.s32.totalorder %s19, 7
      %s232 = scalar_select %p231, %s19, 7
      %p233 = scmp.lt.s32.totalorder %s20, 1
      %s234 = scalar_select %p233, %s20, 1
      %s235 = smul.addr %s232, 2
      %s236 = sadd.s32 %s234, %s235
      %s237 = smul.addr %s236, 4
      %s238 = scalar_lea.vmem %s3, %s237
      %p239 = scmp.lt.s32.totalorder %s19, 7
      %s240 = scalar_select %p239, %s19, 7
      %p241 = scmp.lt.s32.totalorder %s20, 1
      %s242 = scalar_select %p241, %s20, 1
      %s243 = smul.addr %s240, 2
      %s244 = sadd.s32 %s242, %s243
      %s245 = smul.addr %s244, 4
      %s246 = scalar_lea.vmem %s0, %s245
      %p247 = scmp.lt.s32.totalorder %s19, 7
      %s248 = scalar_select %p247, %s19, 7
      %p249 = scmp.lt.s32.totalorder %s21, 1
      %s250 = scalar_select %p249, %s21, 1
      %s251 = smul.addr %s248, 2
      %s252 = sadd.s32 %s250, %s251
      %s253 = smul.addr %s252, 4
      %s254 = scalar_lea.vmem %s1, %s253
      %p255 = scmp.lt.s32.totalorder %s19, 7
      %s256 = scalar_select %p255, %s19, 7
      %p257 = scmp.lt.s32.totalorder %s21, 1
      %s258 = scalar_select %p257, %s21, 1
      %s259 = smul.addr %s256, 2
      %s260 = sadd.s32 %s258, %s259
      %s261 = smul.addr %s260, 4
      %s262 = scalar_lea.vmem %s2, %s261
      %p263 = scmp.lt.s32.totalorder %s19, 7
      %s264 = scalar_select %p263, %s19, 7
      %p265 = scmp.lt.s32.totalorder %s20, 1
      %s266 = scalar_select %p265, %s20, 1
      %s267 = smul.addr %s264, 2
      %s268 = sadd.s32 %s266, %s267
      %s269 = smul.addr %s268, 4
      %s270 = scalar_lea.vmem %s3, %s269
      %p272 = scmp.eq.s32.totalorder %s21, 0
      // Predicated region
      $region33: #{bert_classifier_forward.7} parent=31 // pred_check
        %p273 = pneg %p272
      $region34: #{bert_classifier_forward.7} parent=31 // pred_check_branch
        %275 = sbr.rel (%p273) target = $region36
      $region35: #{bert_classifier_forward.7} parent=31 // pred_region
        %vm276 = vcmask 7168
        %277 = vst.msk [vmem:[#allocation2] sm:$0xff] %vm276, -inf
        %278 = vst.msk [vmem:[#allocation3] sm:$0xff] %vm276, 0.0
        %vm279 = vcmask 64512
        %280 = vst.msk [vmem:[#allocation4] sm:$0xff] %vm279, 0.0
      $region36: #{bert_classifier_forward.7} parent=31 // pred_fallthru
        _
      %v281 = vld [vmem:[%s246] sm:$0xf]
      %v282 = vunpack.c.l.bf16 %v281
      %v283 = vmul.f32 %v282, 0.35351563
      %v284 = vpack.c.bf16 %v283, %v283
      %v285 = vld [vmem:[%s254] sm:$0xf]
      %v286 = vld [vmem:[%s262] sm:$0xf]
      %vm287 = vcmask 64512
      %v289 = vsel %vm287, %v284, 0
      %v292 = vsel %vm287, %v285, 0
      %294 = vmatpush.bf16.xpose.msra.mxu0 0
      %295 = vmatpush.bf16.xpose.msra.mxu0 0
      %296 = vmatpush.bf16.xpose.msra.mxu0 0
      %297 = vmatpush.bf16.xpose.msra.mxu0 0
      %298 = vmatpush.bf16.xpose.msra.mxu0 0
      %299 = vmatpush.bf16.xpose.msra.mxu0 0
      %300 = vmatpush.bf16.xpose.msra.mxu0 0
      %301 = vmatpush.bf16.xpose.msra.mxu0 %v292
      %302 = vmatmul.bf16.gmra.mxu0 %v289
      %v303 = vpop.f32.mrf.mxu0
      %v304 = vadd.f32 0.0, %v303
      %v305 = vpop.f32.mrf.mxu0
      %306 = vdwg.mxu0
      %v307 = vld [vmem:[#allocation2] sm:$0xff]
      %v308 = vsel %vm287, %v304, -inf
      %309 = vmax.xlane.f32.xlu0 %v308
      %v310 = vpop.xlane.xlu0 %309
      %v311 = vmax.f32 %v307, %v310
      %v312 = vsub.f32 %v307, %v311
      %v313 = vmul.f32 %v312, 1.442695
      %v314 = vpow.pop %v313
      %316 = vset.pattern.permute.xlu0 0
      %317 = vperm.xlu0 %316, %v311
      %v318 = vpop.permute.xlu0 %317
      %v320 = vsub.f32 %v304, %v318
      %v321 = vmul.f32 %v320, 1.442695
      %v322 = vpow.pop %v321
      %v323 = vld [vmem:[#allocation3] sm:$0xff]
      %v324 = vmul.f32 %v314, %v323
      %v325 = vsel %vm287, %v322, 0.0
      %326 = vadd.xlane.f32.xlu0 %v325
      %v327 = vpop.xlane.xlu0 %326
      %v328 = vadd.f32 %v324, %v327
      %vm329 = vcmask 7168
      %330 = vst.msk [vmem:[#allocation3] sm:$0xff] %vm329, %v328
      %v331 = vld [vmem:[#allocation4] sm:$0xff]
      %333 = vset.pattern.permute.xlu0 0
      %334 = vperm.xlu0 %333, %v314
      %v335 = vpop.permute.xlu0 %334
      %v337 = vmul.f32 %v335, %v331
      %v338 = vpack.c.bf16 %v322, %v322
      %v340 = vsel %vm287, %v338, 0
      %vm342 = vcmask 1043456
      %v344 = vsel %vm342, %v286, 0
      %346 = vmatpush.bf16.msra.mxu0 0
      %347 = vmatpush.bf16.msra.mxu0 0
      %348 = vmatpush.bf16.msra.mxu0 0
      %349 = vmatpush.bf16.msra.mxu0 0
      %350 = vmatpush.bf16.msra.mxu0 0
      %351 = vmatpush.bf16.msra.mxu0 0
      %352 = vmatpush.bf16.msra.mxu0 0
      %353 = vmatpush.bf16.msra.mxu0 %v344
      %354 = vmatmul.bf16.gmra.mxu0 %v340
      %v355 = vpop.f32.mrf.mxu0
      %v356 = vadd.f32 0.0, %v355
      %v357 = vpop.f32.mrf.mxu0
      %358 = vdwg.mxu0
      %v359 = vadd.f32 %v337, %v356
      %360 = vst.msk [vmem:[#allocation4] sm:$0xff] %vm287, %v359
      %361 = vst.msk [vmem:[#allocation2] sm:$0xff] %vm329, %v311
      %p362 = scmp.eq.s32.totalorder %s21, 1
      // Predicated region
      $region37: #{bert_classifier_forward.7} parent=31 // pred_check
        %p363 = pneg %p362
      $region38: #{bert_classifier_forward.7} parent=31 // pred_check_branch
        %365 = sbr.rel (%p363) target = $region40
      $region39: #{bert_classifier_forward.7} parent=31 // pred_region
        %v366 = vld [vmem:[#allocation3] sm:$0xff]
        %v367 = vrcp.pop %v366
        %v368 = vld [vmem:[#allocation4] sm:$0xff]
        %370 = vset.pattern.permute.xlu0 0
        %371 = vperm.xlu0 %370, %v367
        %v372 = vpop.permute.xlu0 %371
        %v374 = vmul.f32 %v368, %v372
        %v375 = vpack.c.bf16 %v374, %v374
        %vm376 = vcmask 60416
        %377 = vst.msk [vmem:[%s270] sm:$0xf] %vm376, %v375
      $region40: #{bert_classifier_forward.7} parent=31 // pred_fallthru
        _
      %p378 = scmp.lt.s32.totalorder %s19, 7
      %s379 = scalar_select %p378, %s19, 7
      %p380 = scmp.lt.s32.totalorder %s20, 1
      %s381 = scalar_select %p380, %s20, 1
      %s382 = smul.addr %s379, 2
      %s383 = sadd.s32 %s381, %s382
      %s384 = smul.addr %s383, 4
      %s385 = scalar_lea.vmem %s3, %s384
      // Predicated region
      $region41: #{bert_classifier_forward.7} parent=31 // pred_check
        %p386 = pneg %p137
      $region42: #{bert_classifier_forward.7} parent=31 // pred_check_branch
        %388 = sbr.rel (%p386) target = $region44
      $region43: #{bert_classifier_forward.7} parent=31 // pred_region
        _
      $region44: #{bert_classifier_forward.7} parent=31 // pred_fallthru
        _
    $region32: #{bert_classifier_forward.7} parent=5 // pred_fallthru
      _
    %p389 = scmp.le.s32.totalorder 2, %s9
    // Predicated region
    $region45: #{bert_classifier_forward.7} parent=5 // pred_check
      %p390 = pneg %p389
    $region46: #{bert_classifier_forward.7} parent=5 // pred_check_branch
      %392 = sbr.rel (%p390) target = $region48
    $region47: #{bert_classifier_forward.7} parent=5 // pred_region
      %s393 = ssub.s32 %s9, 2
      // Predicated region
      $region49: #{bert_classifier_forward.7} parent=47 // pred_check
        %p394 = pneg %p143
      $region50: #{bert_classifier_forward.7} parent=47 // pred_check_branch
        %396 = sbr.rel (%p394) target = $region52
      $region51: #{bert_classifier_forward.7} parent=47 // pred_region
        %p397 = scmp.lt.s32.totalorder %s22, 7
        %s398 = scalar_select %p397, %s22, 7
        %p399 = scmp.lt.s32.totalorder %s23, 1
        %s400 = scalar_select %p399, %s23, 1
        %s401 = smul.addr %s398, 2
        %s402 = sadd.s32 %s400, %s401
        %s403 = smul.addr %s402, 4
        %s404 = scalar_lea.vmem %s3, %s403
      $region52: #{bert_classifier_forward.7} parent=47 // pred_fallthru
        _
    $region48: #{bert_classifier_forward.7} parent=5 // pred_fallthru
      _
  $region6: #{bert_classifier_forward.7} parent=0 // loop_footer
    %s13 = sadd.s32 1, %s9
  $region7: #{bert_classifier_forward.7} parent=0 // loop_footer_branch
    %8 = sbr.rel target = $region3
  $region8: #{bert_classifier_forward.7} parent=0 // loop_exit
    _

// kernel: bert_classifier_forward.8
$region0: #{bert_classifier_forward.8}
  #allocation0 [shape = 'u32[]', space=smem, size = 0x4, offset = 0x4, fixed_abs, tag = 'smem constant byte address 0x4 - core index']
  #allocation1 [shape = 'u32[72,128]{1,0:T(1,128)}', space=vmem, size = 0x9000, scoped, tag = 'internal scratch']
  %s0 = inlined_call_operand.vmem [shape: bf16[32,32], index: 0, kind: input, shape index: {}]
  %s1 = inlined_call_operand.vmem [shape: bf16[32,32], index: 1, kind: input, shape index: {}]
  %s2 = inlined_call_operand.vmem [shape: bf16[32,32], index: 2, kind: input, shape index: {}]
  %s3 = inlined_call_operand.vmem [shape: f32[1,32], index: 3, kind: input, shape index: {}]
  %s4 = inlined_call_operand.vmem [shape: f32[1,32], index: 4, kind: input, shape index: {}]
  %s5 = inlined_call_operand.vmem [shape: f32[1,32], index: 5, kind: input, shape index: {}]
  %s6 = inlined_call_operand.vmem [shape: bf16[32,64], index: 6, kind: input, shape index: {}]
  %s7 = inlined_call_operand.vmem [shape: f32[1,64], index: 7, kind: input, shape index: {}]
  %s8 = inlined_call_operand.vmem [shape: bf16[64,32], index: 8, kind: input, shape index: {}]
  %s9 = inlined_call_operand.vmem [shape: f32[1,32], index: 9, kind: input, shape index: {}]
  %s10 = inlined_call_operand.vmem [shape: f32[1,32], index: 10, kind: input, shape index: {}]
  %s11 = inlined_call_operand.vmem [shape: f32[1,32], index: 11, kind: input, shape index: {}]
  %s12 = inlined_call_operand.vmem [shape: bf16[32,32], index: 12, kind: output, shape index: {}]
  %s13 = sld [smem:[#allocation0]]
  $region81: #{bert_classifier_forward.8} parent=0
    _
  %s15 = ssub.s32 1, %s13
  %s16 = scalar_select 0, %s15, %s13
  loop: start=0, step=1, limit=6
  $region2: #{bert_classifier_forward.8} parent=0 // loop_pre_header
    _
  $region3: #{bert_classifier_forward.8} parent=0 // loop_header
    %s18 = sphi 0, %s22
    %p19 = scmp.ge.s32.totalorder %s18, 6
    %s28 = sphi 0, %s30
    %s31 = sphi 0, %s28
    %s32 = sphi 0, %s31
    %s48 = sphi 0, %s32
    %s54 = sphi 0, %s56
    %s57 = sphi 0, %s54
    %s58 = sphi 0, %s57
    %s74 = sphi 0, %s58
    %s78 = sphi 0, %s78
    %s80 = sphi 0, %s78
    %s81 = sphi 0, %s80
    %s95 = sphi 0, %s81
    %s99 = sphi 0, %s99
    %s101 = sphi 0, %s99
    %s102 = sphi 0, %s101
    %s116 = sphi 0, %s102
    %s120 = sphi 0, %s120
    %s122 = sphi 0, %s120
    %s123 = sphi 0, %s122
    %s137 = sphi 0, %s123
    %s141 = sphi 0, %s141
    %s143 = sphi 0, %s141
    %s144 = sphi 0, %s143
    %s158 = sphi 0, %s144
    %s162 = sphi 0, %s162
    %s164 = sphi 0, %s162
    %s165 = sphi 0, %s164
    %s179 = sphi 0, %s165
    %s183 = sphi 0, %s183
    %s185 = sphi 0, %s183
    %s186 = sphi 0, %s185
    %s200 = sphi 0, %s186
    %s204 = sphi 0, %s204
    %s206 = sphi 0, %s204
    %s207 = sphi 0, %s206
    %s221 = sphi 0, %s207
    %s225 = sphi 0, %s225
    %s227 = sphi 0, %s225
    %s228 = sphi 0, %s227
    %s242 = sphi 0, %s228
    %s246 = sphi 0, %s246
    %s248 = sphi 0, %s246
    %s249 = sphi 0, %s248
    %s263 = sphi 0, %s249
    %s267 = sphi 0, %s267
    %s269 = sphi 0, %s267
    %s270 = sphi 0, %s269
    %s284 = sphi 0, %s270
    %s290 = sphi 0, %s292
    %s293 = sphi 0, %s290
    %s294 = sphi 0, %s293
    %s310 = sphi 0, %s294
  $region4: #{bert_classifier_forward.8} parent=0 // loop_header_branch
    %21 = sbr.rel (%p19) target = $region8
  $region5: #{bert_classifier_forward.8} parent=0 // loop_body
    %s23 = ssub.s32 %s18, 1
    %s24 = ssub.s32 %s18, 2
    %s25 = sadd.s32 %s18, 1
    %s26 = ssub.s32 %s18, %s25
    %p27 = scmp.eq.s32.totalorder %s26, 0
    %s29 = sadd.s32 %s28, 1
    %s30 = scalar_select %p27, %s28, %s29
    %p33 = pneg %p27
    %p34 = scmp.eq.s32.totalorder %s18, 3
    %p35 = por %p33, %p34
    %p36 = scmp.ne.s32.totalorder %s28, %s31
    %p37 = scmp.eq.s32.totalorder %s18, 0
    %p38 = por %p36, %p37
    %p39 = scmp.ne.s32.totalorder %s28, %s31
    %p40 = scmp.eq.s32.totalorder %s23, 3
    %p41 = por %p39, %p40
    %p42 = scmp.ne.s32.totalorder %s31, %s32
    %p43 = scmp.eq.s32.totalorder %s23, 0
    %p44 = por %p42, %p43
    %p45 = scmp.ne.s32.totalorder %s31, %s32
    %p46 = scmp.eq.s32.totalorder %s24, 3
    %p47 = por %p45, %p46
    %p49 = scmp.ne.s32.totalorder %s32, %s48
    %p50 = scmp.eq.s32.totalorder %s24, 0
    %p51 = por %p49, %p50
    %s52 = ssub.s32 %s18, %s25
    %p53 = scmp.eq.s32.totalorder %s52, 0
    %s55 = sadd.s32 %s54, 1
    %s56 = scalar_select %p53, %s54, %s55
    %p59 = pneg %p53
    %p60 = scmp.eq.s32.totalorder %s18, 3
    %p61 = por %p59, %p60
    %p62 = scmp.ne.s32.totalorder %s54, %s57
    %p63 = scmp.eq.s32.totalorder %s18, 0
    %p64 = por %p62, %p63
    %p65 = scmp.ne.s32.totalorder %s54, %s57
    %p66 = scmp.eq.s32.totalorder %s23, 3
    %p67 = por %p65, %p66
    %p68 = scmp.ne.s32.totalorder %s57, %s58
    %p69 = scmp.eq.s32.totalorder %s23, 0
    %p70 = por %p68, %p69
    %p71 = scmp.ne.s32.totalorder %s57, %s58
    %p72 = scmp.eq.s32.totalorder %s24, 3
    %p73 = por %p71, %p72
    %p75 = scmp.ne.s32.totalorder %s58, %s74
    %p76 = scmp.eq.s32.totalorder %s24, 0
    %p77 = por %p75, %p76
    %s79 = sadd.s32 %s78, 1
    %p82 = scmp.eq.s32.totalorder %s18, 3
    %p83 = scmp.ne.s32.totalorder %s78, %s80
    %p84 = scmp.eq.s32.totalorder %s18, 0
    %p85 = por %p83, %p84
    %p86 = scmp.ne.s32.totalorder %s78, %s80
    %p87 = scmp.eq.s32.totalorder %s23, 3
    %p88 = por %p86, %p87
    %p89 = scmp.ne.s32.totalorder %s80, %s81
    %p90 = scmp.eq.s32.totalorder %s23, 0
    %p91 = por %p89, %p90
    %p92 = scmp.ne.s32.totalorder %s80, %s81
    %p93 = scmp.eq.s32.totalorder %s24, 3
    %p94 = por %p92, %p93
    %p96 = scmp.ne.s32.totalorder %s81, %s95
    %p97 = scmp.eq.s32.totalorder %s24, 0
    %p98 = por %p96, %p97
    %s100 = sadd.s32 %s99, 1
    %p103 = scmp.eq.s32.totalorder %s18, 3
    %p104 = scmp.ne.s32.totalorder %s99, %s101
    %p105 = scmp.eq.s32.totalorder %s18, 0
    %p106 = por %p104, %p105
    %p107 = scmp.ne.s32.totalorder %s99, %s101
    %p108 = scmp.eq.s32.totalorder %s23, 3
    %p109 = por %p107, %p108
    %p110 = scmp.ne.s32.totalorder %s101, %s102
    %p111 = scmp.eq.s32.totalorder %s23, 0
    %p112 = por %p110, %p111
    %p113 = scmp.ne.s32.totalorder %s101, %s102
    %p114 = scmp.eq.s32.totalorder %s24, 3
    %p115 = por %p113, %p114
    %p117 = scmp.ne.s32.totalorder %s102, %s116
    %p118 = scmp.eq.s32.totalorder %s24, 0
    %p119 = por %p117, %p118
    %s121 = sadd.s32 %s120, 1
    %p124 = scmp.eq.s32.totalorder %s18, 3
    %p125 = scmp.ne.s32.totalorder %s120, %s122
    %p126 = scmp.eq.s32.totalorder %s18, 0
    %p127 = por %p125, %p126
    %p128 = scmp.ne.s32.totalorder %s120, %s122
    %p129 = scmp.eq.s32.totalorder %s23, 3
    %p130 = por %p128, %p129
    %p131 = scmp.ne.s32.totalorder %s122, %s123
    %p132 = scmp.eq.s32.totalorder %s23, 0
    %p133 = por %p131, %p132
    %p134 = scmp.ne.s32.totalorder %s122, %s123
    %p135 = scmp.eq.s32.totalorder %s24, 3
    %p136 = por %p134, %p135
    %p138 = scmp.ne.s32.totalorder %s123, %s137
    %p139 = scmp.eq.s32.totalorder %s24, 0
    %p140 = por %p138, %p139
    %s142 = sadd.s32 %s141, 1
    %p145 = scmp.eq.s32.totalorder %s18, 3
    %p146 = scmp.ne.s32.totalorder %s141, %s143
    %p147 = scmp.eq.s32.totalorder %s18, 0
    %p148 = por %p146, %p147
    %p149 = scmp.ne.s32.totalorder %s141, %s143
    %p150 = scmp.eq.s32.totalorder %s23, 3
    %p151 = por %p149, %p150
    %p152 = scmp.ne.s32.totalorder %s143, %s144
    %p153 = scmp.eq.s32.totalorder %s23, 0
    %p154 = por %p152, %p153
    %p155 = scmp.ne.s32.totalorder %s143, %s144
    %p156 = scmp.eq.s32.totalorder %s24, 3
    %p157 = por %p155, %p156
    %p159 = scmp.ne.s32.totalorder %s144, %s158
    %p160 = scmp.eq.s32.totalorder %s24, 0
    %p161 = por %p159, %p160
    %s163 = sadd.s32 %s162, 1
    %p166 = scmp.eq.s32.totalorder %s18, 3
    %p167 = scmp.ne.s32.totalorder %s162, %s164
    %p168 = scmp.eq.s32.totalorder %s18, 0
    %p169 = por %p167, %p168
    %p170 = scmp.ne.s32.totalorder %s162, %s164
    %p171 = scmp.eq.s32.totalorder %s23, 3
    %p172 = por %p170, %p171
    %p173 = scmp.ne.s32.totalorder %s164, %s165
    %p174 = scmp.eq.s32.totalorder %s23, 0
    %p175 = por %p173, %p174
    %p176 = scmp.ne.s32.totalorder %s164, %s165
    %p177 = scmp.eq.s32.totalorder %s24, 3
    %p178 = por %p176, %p177
    %p180 = scmp.ne.s32.totalorder %s165, %s179
    %p181 = scmp.eq.s32.totalorder %s24, 0
    %p182 = por %p180, %p181
    %s184 = sadd.s32 %s183, 1
    %p187 = scmp.eq.s32.totalorder %s18, 3
    %p188 = scmp.ne.s32.totalorder %s183, %s185
    %p189 = scmp.eq.s32.totalorder %s18, 0
    %p190 = por %p188, %p189
    %p191 = scmp.ne.s32.totalorder %s183, %s185
    %p192 = scmp.eq.s32.totalorder %s23, 3
    %p193 = por %p191, %p192
    %p194 = scmp.ne.s32.totalorder %s185, %s186
    %p195 = scmp.eq.s32.totalorder %s23, 0
    %p196 = por %p194, %p195
    %p197 = scmp.ne.s32.totalorder %s185, %s186
    %p198 = scmp.eq.s32.totalorder %s24, 3
    %p199 = por %p197, %p198
    %p201 = scmp.ne.s32.totalorder %s186, %s200
    %p202 = scmp.eq.s32.totalorder %s24, 0
    %p203 = por %p201, %p202
    %s205 = sadd.s32 %s204, 1
    %p208 = scmp.eq.s32.totalorder %s18, 3
    %p209 = scmp.ne.s32.totalorder %s204, %s206
    %p210 = scmp.eq.s32.totalorder %s18, 0
    %p211 = por %p209, %p210
    %p212 = scmp.ne.s32.totalorder %s204, %s206
    %p213 = scmp.eq.s32.totalorder %s23, 3
    %p214 = por %p212, %p213
    %p215 = scmp.ne.s32.totalorder %s206, %s207
    %p216 = scmp.eq.s32.totalorder %s23, 0
    %p217 = por %p215, %p216
    %p218 = scmp.ne.s32.totalorder %s206, %s207
    %p219 = scmp.eq.s32.totalorder %s24, 3
    %p220 = por %p218, %p219
    %p222 = scmp.ne.s32.totalorder %s207, %s221
    %p223 = scmp.eq.s32.totalorder %s24, 0
    %p224 = por %p222, %p223
    %s226 = sadd.s32 %s225, 1
    %p229 = scmp.eq.s32.totalorder %s18, 3
    %p230 = scmp.ne.s32.totalorder %s225, %s227
    %p231 = scmp.eq.s32.totalorder %s18, 0
    %p232 = por %p230, %p231
    %p233 = scmp.ne.s32.totalorder %s225, %s227
    %p234 = scmp.eq.s32.totalorder %s23, 3
    %p235 = por %p233, %p234
    %p236 = scmp.ne.s32.totalorder %s227, %s228
    %p237 = scmp.eq.s32.totalorder %s23, 0
    %p238 = por %p236, %p237
    %p239 = scmp.ne.s32.totalorder %s227, %s228
    %p240 = scmp.eq.s32.totalorder %s24, 3
    %p241 = por %p239, %p240
    %p243 = scmp.ne.s32.totalorder %s228, %s242
    %p244 = scmp.eq.s32.totalorder %s24, 0
    %p245 = por %p243, %p244
    %s247 = sadd.s32 %s246, 1
    %p250 = scmp.eq.s32.totalorder %s18, 3
    %p251 = scmp.ne.s32.totalorder %s246, %s248
    %p252 = scmp.eq.s32.totalorder %s18, 0
    %p253 = por %p251, %p252
    %p254 = scmp.ne.s32.totalorder %s246, %s248
    %p255 = scmp.eq.s32.totalorder %s23, 3
    %p256 = por %p254, %p255
    %p257 = scmp.ne.s32.totalorder %s248, %s249
    %p258 = scmp.eq.s32.totalorder %s23, 0
    %p259 = por %p257, %p258
    %p260 = scmp.ne.s32.totalorder %s248, %s249
    %p261 = scmp.eq.s32.totalorder %s24, 3
    %p262 = por %p260, %p261
    %p264 = scmp.ne.s32.totalorder %s249, %s263
    %p265 = scmp.eq.s32.totalorder %s24, 0
    %p266 = por %p264, %p265
    %s268 = sadd.s32 %s267, 1
    %p271 = scmp.eq.s32.totalorder %s18, 3
    %p272 = scmp.ne.s32.totalorder %s267, %s269
    %p273 = scmp.eq.s32.totalorder %s18, 0
    %p274 = por %p272, %p273
    %p275 = scmp.ne.s32.totalorder %s267, %s269
    %p276 = scmp.eq.s32.totalorder %s23, 3
    %p277 = por %p275, %p276
    %p278 = scmp.ne.s32.totalorder %s269, %s270
    %p279 = scmp.eq.s32.totalorder %s23, 0
    %p280 = por %p278, %p279
    %p281 = scmp.ne.s32.totalorder %s269, %s270
    %p282 = scmp.eq.s32.totalorder %s24, 3
    %p283 = por %p281, %p282
    %p285 = scmp.ne.s32.totalorder %s270, %s284
    %p286 = scmp.eq.s32.totalorder %s24, 0
    %p287 = por %p285, %p286
    %s288 = ssub.s32 %s18, %s25
    %p289 = scmp.eq.s32.totalorder %s288, 0
    %s291 = sadd.s32 %s290, 1
    %s292 = scalar_select %p289, %s290, %s291
    %p295 = pneg %p289
    %p296 = scmp.eq.s32.totalorder %s18, 3
    %p297 = por %p295, %p296
    %p298 = scmp.ne.s32.totalorder %s290, %s293
    %p299 = scmp.eq.s32.totalorder %s18, 0
    %p300 = por %p298, %p299
    %p301 = scmp.ne.s32.totalorder %s290, %s293
    %p302 = scmp.eq.s32.totalorder %s23, 3
    %p303 = por %p301, %p302
    %p304 = scmp.ne.s32.totalorder %s293, %s294
    %p305 = scmp.eq.s32.totalorder %s23, 0
    %p306 = por %p304, %p305
    %p307 = scmp.ne.s32.totalorder %s293, %s294
    %p308 = scmp.eq.s32.totalorder %s24, 3
    %p309 = por %p307, %p308
    %p311 = scmp.ne.s32.totalorder %s294, %s310
    %p312 = scmp.eq.s32.totalorder %s24, 0
    %p313 = por %p311, %p312
    %p314 = scmp.le.s32.totalorder 1, %s18
    %p315 = scmp.lt.s32.totalorder %s18, 5
    %p316 = pnand %p314, %p315
    %p317 = pneg %p316
    // Predicated region
    $region9: #{bert_classifier_forward.8} parent=5 // pred_check
      _
    $region10: #{bert_classifier_forward.8} parent=5 // pred_check_branch
      %319 = sbr.rel (%p316) target = $region12
    $region11: #{bert_classifier_forward.8} parent=5 // pred_region
      %s320 = ssub.s32 %s18, 1
      // Predicated region
      $region13: #{bert_classifier_forward.8} parent=11 // pred_check
        %p321 = pneg %p91
      $region14: #{bert_classifier_forward.8} parent=11 // pred_check_branch
        %323 = sbr.rel (%p321) target = $region16
      $region15: #{bert_classifier_forward.8} parent=11 // pred_region
        _
      $region16: #{bert_classifier_forward.8} parent=11 // pred_fallthru
        _
      // Predicated region
      $region17: #{bert_classifier_forward.8} parent=11 // pred_check
        %p324 = pneg %p112
      $region18: #{bert_classifier_forward.8} parent=11 // pred_check_branch
        %326 = sbr.rel (%p324) target = $region20
      $region19: #{bert_classifier_forward.8} parent=11 // pred_region
        _
      $region20: #{bert_classifier_forward.8} parent=11 // pred_fallthru
        _
      // Predicated region
      $region21: #{bert_classifier_forward.8} parent=11 // pred_check
        %p327 = pneg %p133
      $region22: #{bert_classifier_forward.8} parent=11 // pred_check_branch
        %329 = sbr.rel (%p327) target = $region24
      $region23: #{bert_classifier_forward.8} parent=11 // pred_region
        _
      $region24: #{bert_classifier_forward.8} parent=11 // pred_fallthru
        _
      // Predicated region
      $region25: #{bert_classifier_forward.8} parent=11 // pred_check
        %p330 = pneg %p154
      $region26: #{bert_classifier_forward.8} parent=11 // pred_check_branch
        %332 = sbr.rel (%p330) target = $region28
      $region27: #{bert_classifier_forward.8} parent=11 // pred_region
        _
      $region28: #{bert_classifier_forward.8} parent=11 // pred_fallthru
        _
      // Predicated region
      $region29: #{bert_classifier_forward.8} parent=11 // pred_check
        %p333 = pneg %p175
      $region30: #{bert_classifier_forward.8} parent=11 // pred_check_branch
        %335 = sbr.rel (%p333) target = $region32
      $region31: #{bert_classifier_forward.8} parent=11 // pred_region
        _
      $region32: #{bert_classifier_forward.8} parent=11 // pred_fallthru
        _
      // Predicated region
      $region33: #{bert_classifier_forward.8} parent=11 // pred_check
        %p336 = pneg %p196
      $region34: #{bert_classifier_forward.8} parent=11 // pred_check_branch
        %338 = sbr.rel (%p336) target = $region36
      $region35: #{bert_classifier_forward.8} parent=11 // pred_region
        _
      $region36: #{bert_classifier_forward.8} parent=11 // pred_fallthru
        _
      // Predicated region
      $region37: #{bert_classifier_forward.8} parent=11 // pred_check
        %p339 = pneg %p217
      $region38: #{bert_classifier_forward.8} parent=11 // pred_check_branch
        %341 = sbr.rel (%p339) target = $region40
      $region39: #{bert_classifier_forward.8} parent=11 // pred_region
        _
      $region40: #{bert_classifier_forward.8} parent=11 // pred_fallthru
        _
      // Predicated region
      $region41: #{bert_classifier_forward.8} parent=11 // pred_check
        %p342 = pneg %p238
      $region42: #{bert_classifier_forward.8} parent=11 // pred_check_branch
        %344 = sbr.rel (%p342) target = $region44
      $region43: #{bert_classifier_forward.8} parent=11 // pred_region
        _
      $region44: #{bert_classifier_forward.8} parent=11 // pred_fallthru
        _
      // Predicated region
      $region45: #{bert_classifier_forward.8} parent=11 // pred_check
        %p345 = pneg %p259
      $region46: #{bert_classifier_forward.8} parent=11 // pred_check_branch
        %347 = sbr.rel (%p345) target = $region48
      $region47: #{bert_classifier_forward.8} parent=11 // pred_region
        _
      $region48: #{bert_classifier_forward.8} parent=11 // pred_fallthru
        _
      // Predicated region
      $region49: #{bert_classifier_forward.8} parent=11 // pred_check
        %p348 = pneg %p280
      $region50: #{bert_classifier_forward.8} parent=11 // pred_check_branch
        %350 = sbr.rel (%p348) target = $region52
      $region51: #{bert_classifier_forward.8} parent=11 // pred_region
        _
      $region52: #{bert_classifier_forward.8} parent=11 // pred_fallthru
        _
    $region12: #{bert_classifier_forward.8} parent=5 // pred_fallthru
      _
    %p351 = scmp.lt.s32.totalorder %s18, 4
    // Predicated region
    $region53: #{bert_classifier_forward.8} parent=5 // pred_check
      %p352 = pneg %p351
    $region54: #{bert_classifier_forward.8} parent=5 // pred_check_branch
      %354 = sbr.rel (%p352) target = $region56
    $region55: #{bert_classifier_forward.8} parent=5 // pred_region
      // Predicated region
      $region57: #{bert_classifier_forward.8} parent=55 // pred_check
        %p355 = pneg %p38
      $region58: #{bert_classifier_forward.8} parent=55 // pred_check_branch
        %357 = sbr.rel (%p355) target = $region60
      $region59: #{bert_classifier_forward.8} parent=55 // pred_region
        %p358 = scmp.lt.s32.totalorder %s18, 3
        %s359 = scalar_select %p358, %s18, 3
        %s360 = smul.addr %s359, 4
        %s361 = scalar_lea.vmem %s0, %s360
      $region60: #{bert_classifier_forward.8} parent=55 // pred_fallthru
        _
      // Predicated region
      $region61: #{bert_classifier_forward.8} parent=55 // pred_check
        %p362 = pneg %p64
      $region62: #{bert_classifier_forward.8} parent=55 // pred_check_branch
        %364 = sbr.rel (%p362) target = $region64
      $region63: #{bert_classifier_forward.8} parent=55 // pred_region
        %p365 = scmp.lt.s32.totalorder %s18, 3
        %s366 = scalar_select %p365, %s18, 3
        %s367 = smul.addr %s366, 4
        %s368 = scalar_lea.vmem %s1, %s367
      $region64: #{bert_classifier_forward.8} parent=55 // pred_fallthru
        _
    $region56: #{bert_classifier_forward.8} parent=5 // pred_fallthru
      _
    %p369 = scmp.le.s32.totalorder 1, %s18
    %p370 = scmp.lt.s32.totalorder %s18, 5
    %p371 = pnand %p369, %p370
    %p372 = pneg %p371
    // Predicated region
    $region65: #{bert_classifier_forward.8} parent=5 // pred_check
      _
    $region66: #{bert_classifier_forward.8} parent=5 // pred_check_branch
      %374 = sbr.rel (%p371) target = $region68
    $region67: #{bert_classifier_forward.8} parent=5 // pred_region
      %s375 = ssub.s32 %s18, 1
      %p376 = scmp.lt.s32.totalorder %s23, 3
      %s377 = scalar_select %p376, %s23, 3
      %s378 = smul.addr %s377, 4
      %s379 = scalar_lea.vmem %s0, %s378
      %p380 = pneg %p44
      %p381 = pneg %p41
      %p382 = scmp.lt.s32.totalorder %s23, 3
      %s383 = scalar_select %p382, %s23, 3
      %s384 = smul.addr %s383, 4
      %s385 = scalar_lea.vmem %s1, %s384
      %p386 = pneg %p70
      %p387 = pneg %p67
      %p388 = pneg %p91
      %p389 = pneg %p88
      %p390 = pneg %p112
      %p391 = pneg %p109
      %p392 = pneg %p133
      %p393 = pneg %p130
      %p394 = pneg %p154
      %p395 = pneg %p151
      %p396 = pneg %p175
      %p397 = pneg %p172
      %p398 = pneg %p196
      %p399 = pneg %p193
      %p400 = pneg %p217
      %p401 = pneg %p214
      %p402 = pneg %p238
      %p403 = pneg %p235
      %p404 = pneg %p259
      %p405 = pneg %p256
      %p406 = pneg %p280
      %p407 = pneg %p277
      %p408 = pneg %p306
      %p409 = pneg %p303
      %p410 = scmp.lt.s32.totalorder %s23, 3
      %s411 = scalar_select %p410, %s23, 3
      %s412 = smul.addr %s411, 4
      %s413 = scalar_lea.vmem %s12, %s412
      %p414 = scmp.lt.s32.totalorder %s23, 3
      %s415 = scalar_select %p414, %s23, 3
      %s416 = smul.addr %s415, 4
      %s417 = scalar_lea.vmem %s0, %s416
      %p418 = scmp.lt.s32.totalorder %s23, 3
      %s419 = scalar_select %p418, %s23, 3
      %s420 = smul.addr %s419, 4
      %s421 = scalar_lea.vmem %s1, %s420
      %p422 = scmp.lt.s32.totalorder %s23, 3
      %s423 = scalar_select %p422, %s23, 3
      %s424 = smul.addr %s423, 4
      %s425 = scalar_lea.vmem %s12, %s424
      %v427 = vld [vmem:[%s421] sm:$0xf]
      %v428 = vunpack.c.l.bf16 %v427
      %v429 = vld [vmem:[%s417] sm:$0xf]
      %v430 = vld [vmem:[%s2] sm:$0xf]
      %v431 = vld [vmem:[%s2 + $0x4] sm:$0xf]
      %v432 = vld [vmem:[%s2 + $0x8] sm:$0xf]
      %v433 = vld [vmem:[%s2 + $0xc] sm:$0xf]
      %v434 = vld [vmem:[%s3] sm:$0x1]
      %v436 = vperm.slane %v434, 0
      %v442 = vunpack.c.l.b16 %v430
      %v443 = vunpack.c.l.b16 %v431
      %v444 = vunpack.c.l.b16 %v432
      %v445 = vunpack.c.l.b16 %v433
      %v446 = vpack.c.b16 %v443, %v442
      %v447 = vpack.c.b16 %v445, %v444
      %vm450 = vcmask 261120
      %v452 = vsel %vm450, %v429, 0
      %454 = vmatpush.bf16.msra.mxu0 0
      %455 = vmatpush.bf16.msra.mxu0 0
      %456 = vmatpush.bf16.msra.mxu0 0
      %457 = vmatpush.bf16.msra.mxu0 0
      %458 = vmatpush.bf16.msra.mxu0 0
      %459 = vmatpush.bf16.msra.mxu0 0
      %460 = vmatpush.bf16.msra.mxu0 %v447
      %461 = vmatpush.bf16.msra.mxu0 %v446
      %462 = vmatmul.bf16.gmra.mxu0 %v452
      %v463 = vpop.f32.mrf.mxu0
      %v464 = vadd.f32 %v436, %v463
      %v465 = vpop.f32.mrf.mxu0
      %466 = vdwg.mxu0
      %v467 = vadd.f32 %v464, %v428
      %v468 = vld [vmem:[%s4] sm:$0x1]
      %v469 = vld [vmem:[%s5] sm:$0x1]
      %v470 = vsel %vm450, %v467, 0.0
      %471 = vadd.xlane.f32.xlu0 %v470
      %v472 = vpop.xlane.xlu0 %471
      %v473 = vrcp.pop 32.0
      %v474 = vmul.f32 32.0, %v473
      %v475 = vsub.f32 1.0, %v474
      %v476 = vmul.f32 %v473, %v475
      %v477 = vadd.f32 %v473, %v476
      %vm478 = vweird.f32 %v473
      %v479 = vsel %vm478, %v473, %v477
      %v480 = vmul.f32 %v472, %v479
      %v481 = vsub.f32 %v467, %v480
      %v482 = vmul.f32 %v481, %v481
      %v483 = vsel %vm450, %v482, 0.0
      %484 = vadd.xlane.f32.xlu0 %v483
      %v485 = vpop.xlane.xlu0 %484
      %v486 = vmul.f32 %v485, %v479
      %v487 = vadd.f32 %v486, 1e-12
      %v488 = vrsqrt.pop %v487
      %v489 = vmul.f32 %v488, %v487
      %v490 = vmul.f32 %v489, %v488
      %v491 = vmul.f32 0.5, %v490
      %v492 = vsub.f32 1.5, %v491
      %v493 = vmul.f32 %v488, %v492
      %vm494 = vweird.f32 %v487
      %vm495 = vweird.f32 %v488
      %vm496 = vmor %vm494, %vm495
      %v497 = vsel %vm496, %v488, %v493
      %v498 = vmul.f32 %v481, %v497
      %v500 = vperm.slane %v468, 0
      %v502 = vmul.f32 %v498, %v500
      %v504 = vperm.slane %v469, 0
      %v506 = vadd.f32 %v502, %v504
      %v507 = vpack.c.bf16 %v506, %v506
      %v508 = vld [vmem:[%s6] sm:$0xf]
      %v509 = vld [vmem:[%s6 + $0x4] sm:$0xf]
      %v510 = vld [vmem:[%s6 + $0x8] sm:$0xf]
      %v511 = vld [vmem:[%s6 + $0xc] sm:$0xf]
      %v512 = vld [vmem:[%s7] sm:$0x1]
      %v514 = vperm.slane %v512, 0
      %v520 = vunpack.c.l.b16 %v508
      %v521 = vunpack.c.l.b16 %v509
      %v522 = vunpack.c.l.b16 %v510
      %v523 = vunpack.c.l.b16 %v511
      %v524 = vpack.c.b16 %v521, %v520
      %v525 = vpack.c.b16 %v523, %v522
      %v529 = vsel %vm450, %v507, 0
      %531 = vmatpush.bf16.msra.mxu0 0
      %532 = vmatpush.bf16.msra.mxu0 0
      %533 = vmatpush.bf16.msra.mxu0 0
      %534 = vmatpush.bf16.msra.mxu0 0
      %535 = vmatpush.bf16.msra.mxu0 0
      %536 = vmatpush.bf16.msra.mxu0 0
      %537 = vmatpush.bf16.msra.mxu0 %v525
      %538 = vmatpush.bf16.msra.mxu0 %v524
      %539 = vmatmul.bf16.gmra.mxu0 %v529
      %v540 = vpop.f32.mrf.mxu0
      %v541 = vadd.f32 %v514, %v540
      %v542 = vpop.f32.mrf.mxu0
      %543 = vdwg.mxu0
      %v544 = vmul.f32 %v541, 0.5
      %v545 = vmul.f32 %v541, 0.044715
      %v546 = vmul.f32 %v545, %v541
      %v547 = vmul.f32 %v546, %v541
      %v548 = vadd.f32 %v541, %v547
      %v549 = vmul.f32 %v548, 0.7978845
      %v550 = vtanh.pop %v549
      %v551 = vadd.f32 %v550, 1.0
      %v552 = vmul.f32 %v544, %v551
      %v553 = vpack.c.bf16 %v552, %v552
      %v554 = vld [vmem:[%s8] sm:$0xf]
      %v555 = vld [vmem:[%s8 + $0x4] sm:$0xf]
      %v556 = vld [vmem:[%s8 + $0x8] sm:$0xf]
      %v557 = vld [vmem:[%s8 + $0xc] sm:$0xf]
      %v558 = vld [vmem:[%s8 + $0x10] sm:$0xf]
      %v559 = vld [vmem:[%s8 + $0x14] sm:$0xf]
      %v560 = vld [vmem:[%s8 + $0x18] sm:$0xf]
      %v561 = vld [vmem:[%s8 + $0x1c] sm:$0xf]
      %v562 = vld [vmem:[%s9] sm:$0x1]
      %v564 = vperm.slane %v562, 0
      %v574 = vunpack.c.l.b16 %v554
      %v575 = vunpack.c.l.b16 %v555
      %v576 = vunpack.c.l.b16 %v556
      %v577 = vunpack.c.l.b16 %v557
      %v578 = vunpack.c.l.b16 %v558
      %v579 = vunpack.c.l.b16 %v559
      %v580 = vunpack.c.l.b16 %v560
      %v581 = vunpack.c.l.b16 %v561
      %v582 = vpack.c.b16 %v575, %v574
      %v583 = vpack.c.b16 %v577, %v576
      %v584 = vpack.c.b16 %v579, %v578
      %v585 = vpack.c.b16 %v581, %v580
      %vm590 = vcmask 523264
      %v592 = vsel %vm590, %v553, 0
      %594 = vmatpush.bf16.msra.mxu0 0
      %595 = vmatpush.bf16.msra.mxu0 0
      %596 = vmatpush.bf16.msra.mxu0 0
      %597 = vmatpush.bf16.msra.mxu0 0
      %598 = vmatpush.bf16.msra.mxu0 %v585
      %599 = vmatpush.bf16.msra.mxu0 %v584
      %600 = vmatpush.bf16.msra.mxu0 %v583
      %601 = vmatpush.bf16.msra.mxu0 %v582
      %602 = vmatmul.bf16.gmra.mxu0 %v592
      %v603 = vpop.f32.mrf.mxu0
      %v604 = vadd.f32 %v564, %v603
      %v605 = vpop.f32.mrf.mxu0
      %606 = vdwg.mxu0
      %v607 = vadd.f32 %v604, %v506
      %v608 = vld [vmem:[%s10] sm:$0x1]
      %v609 = vld [vmem:[%s11] sm:$0x1]
      %v610 = vsel %vm450, %v607, 0.0
      %611 = vadd.xlane.f32.xlu0 %v610
      %v612 = vpop.xlane.xlu0 %611
      %v613 = vmul.f32 %v612, %v479
      %v614 = vsub.f32 %v607, %v613
      %v615 = vmul.f32 %v614, %v614
      %v616 = vsel %vm450, %v615, 0.0
      %617 = vadd.xlane.f32.xlu0 %v616
      %v618 = vpop.xlane.xlu0 %617
      %v619 = vmul.f32 %v618, %v479
      %v620 = vadd.f32 %v619, 1e-12
      %v621 = vrsqrt.pop %v620
      %v622 = vmul.f32 %v621, %v620
      %v623 = vmul.f32 %v622, %v621
      %v624 = vmul.f32 0.5, %v623
      %v625 = vsub.f32 1.5, %v624
      %v626 = vmul.f32 %v621, %v625
      %vm627 = vweird.f32 %v620
      %vm628 = vweird.f32 %v621
      %vm629 = vmor %vm627, %vm628
      %v630 = vsel %vm629, %v621, %v626
      %v631 = vmul.f32 %v614, %v630
      %v633 = vperm.slane %v608, 0
      %v635 = vmul.f32 %v631, %v633
      %v637 = vperm.slane %v609, 0
      %v639 = vadd.f32 %v635, %v637
      %v640 = vpack.c.bf16 %v639, %v639
      %vm641 = vcmask 257024
      %642 = vst.msk [vmem:[%s425] sm:$0xf] %vm641, %v640
      %p643 = scmp.lt.s32.totalorder %s23, 3
      %s644 = scalar_select %p643, %s23, 3
      %s645 = smul.addr %s644, 4
      %s646 = scalar_lea.vmem %s12, %s645
      // Predicated region
      $region69: #{bert_classifier_forward.8} parent=67 // pred_check
        %p647 = pneg %p303
      $region70: #{bert_classifier_forward.8} parent=67 // pred_check_branch
        %649 = sbr.rel (%p647) target = $region72
      $region71: #{bert_classifier_forward.8} parent=67 // pred_region
        _
      $region72: #{bert_classifier_forward.8} parent=67 // pred_fallthru
        _
    $region68: #{bert_classifier_forward.8} parent=5 // pred_fallthru
      _
    %p650 = scmp.le.s32.totalorder 2, %s18
    // Predicated region
    $region73: #{bert_classifier_forward.8} parent=5 // pred_check
      %p651 = pneg %p650
    $region74: #{bert_classifier_forward.8} parent=5 // pred_check_branch
      %653 = sbr.rel (%p651) target = $region76
    $region75: #{bert_classifier_forward.8} parent=5 // pred_region
      %s654 = ssub.s32 %s18, 2
      // Predicated region
      $region77: #{bert_classifier_forward.8} parent=75 // pred_check
        %p655 = pneg %p309
      $region78: #{bert_classifier_forward.8} parent=75 // pred_check_branch
        %657 = sbr.rel (%p655) target = $region80
      $region79: #{bert_classifier_forward.8} parent=75 // pred_region
        %p658 = scmp.lt.s32.totalorder %s24, 3
        %s659 = scalar_select %p658, %s24, 3
        %s660 = smul.addr %s659, 4
        %s661 = scalar_lea.vmem %s12, %s660
      $region80: #{bert_classifier_forward.8} parent=75 // pred_fallthru
        _
    $region76: #{bert_classifier_forward.8} parent=5 // pred_fallthru
      _
  $region6: #{bert_classifier_forward.8} parent=0 // loop_footer
    %s22 = sadd.s32 1, %s18
  $region7: #{bert_classifier_forward.8} parent=0 // loop_footer_branch
    %17 = sbr.rel target = $region3
  $region8: #{bert_classifier_forward.8} parent=0 // loop_exit
    _

</llo_original>
